<compile_context>
chip_gen: v6e
topology: v6e:2x2x1
jax: 0.10.0
libtpu: 0.0.40
codegen_flags: <defaults>
</compile_context>

<pallas_src>
import functools

import jax
import jax.numpy as jnp
from jax.experimental import pallas as pl
from jax.experimental.pallas import tpu as pltpu


def _round_up(x, m):
    return ((x + m - 1) // m) * m


# ----------------------------------------------------------------------------
# Fused decoder-step kernel
# ----------------------------------------------------------------------------

def _decoder_step_kernel(x_ref, hcat_ref, enc_ref,
                         wih_ref, whh_ref, bih_ref, bhh_ref,
                         wout_ref, bout_ref,
                         probs_ref, hcat_out_ref,
                         *, hp, v, vp):
    """One full Decoder.forward step for a (Bt) batch tile.

    x_ref    : (Bt, Ep)        embedded previous token
    hcat_ref : (Bt, 2*Hp)      [h_fwd | h_bwd]
    enc_ref  : (Bt, T, Hp)     encoder outputs
    wih_ref  : (Ep, 6*Hp)      [fwd r|z|n | bwd r|z|n]   (each gate block Hp wide)
    whh_ref  : (2*Hp, 6*Hp)    block-diagonal: rows [0,Hp) feed fwd gates,
                               rows [Hp,2Hp) feed bwd gates
    wout_ref : (Hp, Vp), bout_ref : (1, Vp)
    """
    x = x_ref[...]
    h_cat = hcat_ref[...]
    enc = enc_ref[...]

    # ---- bidirectional 1-step GRU: both directions' gates in ONE matmul each ----
    gi = jnp.dot(x, wih_ref[...], preferred_element_type=jnp.float32) + bih_ref[...]
    gh = jnp.dot(h_cat, whh_ref[...], preferred_element_type=jnp.float32) + bhh_ref[...]

    def _gru_update(gi_d, gh_d, h_d):
        # PyTorch gate order r, z, n; each gate occupies a 128-aligned Hp block.
        r = jax.nn.sigmoid(gi_d[:, :hp] + gh_d[:, :hp])
        z = jax.nn.sigmoid(gi_d[:, hp:2 * hp] + gh_d[:, hp:2 * hp])
        n = jnp.tanh(gi_d[:, 2 * hp:] + r * gh_d[:, 2 * hp:])
        return (1.0 - z) * n + z * h_d

    hf = _gru_update(gi[:, :3 * hp], gh[:, :3 * hp], h_cat[:, :hp])
    hb = _gru_update(gi[:, 3 * hp:], gh[:, 3 * hp:], h_cat[:, hp:])
    hcat_out_ref[...] = jnp.concatenate([hf, hb], axis=-1)    # one lane-dense store

    # ---- current_output[...,:H] + current_output[...,H:] ----
    cur = hf + hb                                             # (Bt, Hp)

    # ---- Luong "dot" attention, q = 1: VPU multiply + XLU reduce (MXU stays free) ----
    scores = jnp.sum(cur[:, None, :] * enc, axis=-1)          # (Bt, T)
    m = jnp.max(scores, axis=-1, keepdims=True)
    e = jnp.exp(scores - m)
    attn = e * pl.reciprocal(jnp.sum(e, axis=-1, keepdims=True), approx=True)
    ctx = jnp.sum(attn[:, :, None] * enc, axis=1)             # (Bt, Hp)

    # ---- Linear(H, V) + softmax over the vocab ----
    logits = (jnp.dot(ctx, wout_ref[...], preferred_element_type=jnp.float32)
              + bout_ref[...])                                # (Bt, Vp)
    if vp != v:
        # padded vocab lanes must get zero probability
        col = jax.lax.broadcasted_iota(jnp.int32, logits.shape, 1)
        logits = jnp.where(col < v, logits, -1e30)
    lm = jnp.max(logits, axis=-1, keepdims=True)
    le = jnp.exp(logits - lm)
    probs_ref[...] = le * pl.reciprocal(jnp.sum(le, axis=-1, keepdims=True), approx=True)


# ----------------------------------------------------------------------------
# Wrapper: padding / packing + pallas_call
# ----------------------------------------------------------------------------

def pack_decoder_params(params, embedding_dim, hidden_size, vocab_size):
    """Pack torch-layout params into the padded, concatenated kernel layout (done once)."""
    E, H, V = embedding_dim, hidden_size, vocab_size
    Ep, Hp, Vp = _round_up(E, 128), _round_up(H, 128), _round_up(V, 128)

    wih = jnp.zeros((Ep, 6 * Hp), jnp.float32)
    whh = jnp.zeros((2 * Hp, 6 * Hp), jnp.float32)
    bih = jnp.zeros((1, 6 * Hp), jnp.float32)
    bhh = jnp.zeros((1, 6 * Hp), jnp.float32)
    for d, name in enumerate(("gru_fwd", "gru_bwd")):
        p = params[name]
        for g in range(3):  # r, z, n
            col = d * 3 * Hp + g * Hp
            wih = wih.at[:E, col:col + H].set(p["w_ih"][g * H:(g + 1) * H, :].T)
            whh = whh.at[d * Hp:d * Hp + H, col:col + H].set(
                p["w_hh"][g * H:(g + 1) * H, :].T)
            bih = bih.at[0, col:col + H].set(p["b_ih"][g * H:(g + 1) * H])
            bhh = bhh.at[0, col:col + H].set(p["b_hh"][g * H:(g + 1) * H])

    wout = jnp.zeros((Hp, Vp), jnp.float32).at[:H, :V].set(params["out_w"].T)
    bout = jnp.zeros((1, Vp), jnp.float32).at[0, :V].set(params["out_b"])
    return {"wihT": wih, "whhT": whh, "bih": bih, "bhh": bhh,
            "woutT": wout, "bout": bout}


def decoder_forward(packed, pre_embedded, pre_hidden, encoder_output, *,
                    hidden_size, vocab_size):
    """Decoder.forward. Returns (probs (B,V), current_hidden (2,B,H))."""
    B, _, E = pre_embedded.shape
    T = encoder_output.shape[1]
    H, V = hidden_size, vocab_size
    Ep, Hp, Vp = _round_up(E, 128), _round_up(H, 128), _round_up(V, 128)
    Bt = 8                       # f32 sublane tile
    Bp = _round_up(B, Bt)

    # pad inputs to lane/sublane-dense shapes (padding stays exactly zero through
    # the GRU update, attention and projection, so real lanes are unaffected)
    x = jnp.zeros((Bp, Ep), jnp.float32).at[:B, :E].set(
        pre_embedded[:, 0, :].astype(jnp.float32))
    hcat = jnp.zeros((Bp, 2 * Hp), jnp.float32)
    hcat = hcat.at[:B, :H].set(pre_hidden[0].astype(jnp.float32))
    hcat = hcat.at[:B, Hp:Hp + H].set(pre_hidden[1].astype(jnp.float32))
    enc = jnp.zeros((Bp, T, Hp), jnp.float32).at[:B, :, :H].set(
        encoder_output.astype(jnp.float32))

    kernel = functools.partial(_decoder_step_kernel, hp=Hp, v=V, vp=Vp)

    probs_pad, hcat_new = pl.pallas_call(
        kernel,
        out_shape=(
            jax.ShapeDtypeStruct((Bp, Vp), jnp.float32),
            jax.ShapeDtypeStruct((Bp, 2 * Hp), jnp.float32),
        ),
        grid=(Bp // Bt,),
        in_specs=[
            pl.BlockSpec((Bt, Ep), lambda i: (i, 0)),           # x
            pl.BlockSpec((Bt, 2 * Hp), lambda i: (i, 0)),       # [hf | hb]
            pl.BlockSpec((Bt, T, Hp), lambda i: (i, 0, 0)),     # encoder_output
            pl.BlockSpec((Ep, 6 * Hp), lambda i: (0, 0)),       # W_ih (both dirs)
            pl.BlockSpec((2 * Hp, 6 * Hp), lambda i: (0, 0)),   # W_hh (block-diag)
            pl.BlockSpec((1, 6 * Hp), lambda i: (0, 0)),        # b_ih
            pl.BlockSpec((1, 6 * Hp), lambda i: (0, 0)),        # b_hh
            pl.BlockSpec((Hp, Vp), lambda i: (0, 0)),           # W_out^T
            pl.BlockSpec((1, Vp), lambda i: (0, 0)),            # b_out
        ],
        out_specs=(
            pl.BlockSpec((Bt, Vp), lambda i: (i, 0)),
            pl.BlockSpec((Bt, 2 * Hp), lambda i: (i, 0)),
        ),
        compiler_params=pltpu.CompilerParams(
            dimension_semantics=("parallel",),       # batch tiles -> both TCs on v7x
            vmem_limit_bytes=64 * 1024 * 1024,
        ),
    )(x, hcat, enc,
      packed["wihT"], packed["whhT"], packed["bih"], packed["bhh"],
      packed["woutT"], packed["bout"])

    probs = probs_pad[:B, :V]
    current_hidden = jnp.stack([hcat_new[:B, :H], hcat_new[:B, Hp:Hp + H]], axis=0)
    return probs, current_hidden


# ----------------------------------------------------------------------------
# Parameter init (PyTorch-style) and pure-JAX reference
# ----------------------------------------------------------------------------

def init_decoder_params(key, embedding_dim, hidden_size, vocab_size):
    H = hidden_size
    bound = 1.0 / (H ** 0.5)
    ks = jax.random.split(key, 10)

    def u(k_, shape):
        return jax.random.uniform(k_, shape, jnp.float32, -bound, bound)

    return {
        "gru_fwd": {"w_ih": u(ks[0], (3 * H, embedding_dim)),
                    "w_hh": u(ks[1], (3 * H, H)),
                    "b_ih": u(ks[2], (3 * H,)),
                    "b_hh": u(ks[3], (3 * H,))},
        "gru_bwd": {"w_ih": u(ks[4], (3 * H, embedding_dim)),
                    "w_hh": u(ks[5], (3 * H, H)),
                    "b_ih": u(ks[6], (3 * H,)),
                    "b_hh": u(ks[7], (3 * H,))},
        "out_w": u(ks[8], (vocab_size, H)),
        "out_b": u(ks[9], (vocab_size,)),
    }


def decoder_reference(params, pre_embedded, pre_hidden, encoder_output):
    """Plain-JAX reference of Decoder.forward (same math, no Pallas)."""
    x = pre_embedded[:, 0, :]
    H = pre_hidden.shape[-1]

    def gru_dir(p, h):
        gi = x @ p["w_ih"].T + p["b_ih"]
        gh = h @ p["w_hh"].T + p["b_hh"]
        r = jax.nn.sigmoid(gi[:, :H] + gh[:, :H])
        z = jax.nn.sigmoid(gi[:, H:2 * H] + gh[:, H:2 * H])
        n = jnp.tanh(gi[:, 2 * H:] + r * gh[:, 2 * H:])
        return (1.0 - z) * n + z * h

    hf = gru_dir(params["gru_fwd"], pre_hidden[0])
    hb = gru_dir(params["gru_bwd"], pre_hidden[1])
    cur = hf + hb
    scores = jnp.einsum("bh,bth->bt", cur, encoder_output)
    w = jax.nn.softmax(scores, axis=-1)
    ctx = jnp.einsum("bt,bth->bh", w, encoder_output)
    logits = ctx @ params["out_w"].T + params["out_b"]
    return jax.nn.softmax(logits, axis=-1), jnp.stack([hf, hb], axis=0)


# ----------------------------------------------------------------------------
# Demo
# ----------------------------------------------------------------------------

if __name__ == "__main__":
    B, T, E, H, V = 2, 8, 16, 32, 40

    key = jax.random.PRNGKey(0)
    kp, k1, k2, k3 = jax.random.split(key, 4)
    params = init_decoder_params(kp, embedding_dim=E, hidden_size=H, vocab_size=V)

    pre_embedded = jax.random.normal(k1, (B, 1, E), jnp.float32)   # embedded prev token
    pre_hidden = jax.random.normal(k2, (2, B, H), jnp.float32)     # (num_dirs, B, H)
    encoder_output = jax.random.normal(k3, (B, T, H), jnp.float32)

    packed = pack_decoder_params(params, E, H, V)
    fwd = jax.jit(functools.partial(decoder_forward, hidden_size=H, vocab_size=V))

    probs, hidden = fwd(packed, pre_embedded, pre_hidden, encoder_output)
    probs, hidden = jax.block_until_ready((probs, hidden))

    assert probs.shape == (B, V)
    assert hidden.shape == (2, B, H)
    # softmax output (approx reciprocal -> loose tolerance)
    assert bool(jnp.allclose(probs.sum(-1), 1.0, atol=1e-2))

    ref_probs, ref_hidden = decoder_reference(params, pre_embedded, pre_hidden,
                                              encoder_output)
    assert bool(jnp.allclose(hidden, ref_hidden, atol=1e-2, rtol=1e-2))
    assert bool(jnp.allclose(probs, ref_probs, atol=1e-2, rtol=1e-2))

    print("KERNEL_OK")
</pallas_src>

<mosaic_0001>
module attributes {stable_mosaic.version = 11 : i64} {
  func.func @_decoder_step_kernel(%arg0: i32, %arg1: memref<8x128xf32, #tpu.memory_space<vmem>>, %arg2: memref<8x256xf32, #tpu.memory_space<vmem>>, %arg3: memref<8x8x128xf32, #tpu.memory_space<vmem>>, %arg4: memref<128x768xf32, #tpu.memory_space<vmem>>, %arg5: memref<256x768xf32, #tpu.memory_space<vmem>>, %arg6: memref<1x768xf32, #tpu.memory_space<vmem>>, %arg7: memref<1x768xf32, #tpu.memory_space<vmem>>, %arg8: memref<128x128xf32, #tpu.memory_space<vmem>>, %arg9: memref<1x128xf32, #tpu.memory_space<vmem>>, %arg10: memref<8x128xf32, #tpu.memory_space<vmem>>, %arg11: memref<8x256xf32, #tpu.memory_space<vmem>>) attributes {dimension_semantics = [#tpu.dimension_semantics<parallel>], iteration_bounds = array<i64: 1>, scalar_prefetch = 0 : i64, scratch_operands = 0 : i64, tpu.core_type = #tpu.core_type<tc>, window_params = [{transform_indices = @transform_0, window_bounds = array<i64: 8, 128>}, {transform_indices = @transform_1, window_bounds = array<i64: 8, 256>}, {transform_indices = @transform_2, window_bounds = array<i64: 8, 8, 128>}, {pipeline_mode = #tpu.pipeline_mode<synchronous>, transform_indices = @transform_3, window_bounds = array<i64: 128, 768>}, {pipeline_mode = #tpu.pipeline_mode<synchronous>, transform_indices = @transform_4, window_bounds = array<i64: 256, 768>}, {pipeline_mode = #tpu.pipeline_mode<synchronous>, transform_indices = @transform_5, window_bounds = array<i64: 1, 768>}, {pipeline_mode = #tpu.pipeline_mode<synchronous>, transform_indices = @transform_6, window_bounds = array<i64: 1, 768>}, {pipeline_mode = #tpu.pipeline_mode<synchronous>, transform_indices = @transform_7, window_bounds = array<i64: 128, 128>}, {pipeline_mode = #tpu.pipeline_mode<synchronous>, transform_indices = @transform_8, window_bounds = array<i64: 1, 128>}, {transform_indices = @transform_9, window_bounds = array<i64: 8, 128>}, {transform_indices = @transform_10, window_bounds = array<i64: 8, 256>}]} {
    %c0 = arith.constant 0 : index
    %c0_0 = arith.constant 0 : index
    %0 = vector.load %arg1[%c0, %c0_0] : memref<8x128xf32, #tpu.memory_space<vmem>>, vector<8x128xf32>
    %c0_1 = arith.constant 0 : index
    %c0_2 = arith.constant 0 : index
    %1 = vector.load %arg2[%c0_1, %c0_2] : memref<8x256xf32, #tpu.memory_space<vmem>>, vector<8x256xf32>
    %c0_3 = arith.constant 0 : index
    %c0_4 = arith.constant 0 : index
    %c0_5 = arith.constant 0 : index
    %2 = vector.load %arg3[%c0_3, %c0_4, %c0_5] : memref<8x8x128xf32, #tpu.memory_space<vmem>>, vector<8x8x128xf32>
    %c0_6 = arith.constant 0 : index
    %c0_7 = arith.constant 0 : index
    %3 = vector.load %arg4[%c0_6, %c0_7] : memref<128x768xf32, #tpu.memory_space<vmem>>, vector<128x768xf32>
    %cst = arith.constant dense<0.000000e+00> : vector<8x768xf32>
    %4 = tpu.matmul %0, %3, %cst {dimension_numbers = #tpu.dot_dimension_numbers<[1], [0], [0], [1], [0, 0, 1, 1], [], []>} : vector<8x128xf32>, vector<128x768xf32>, vector<8x768xf32> -> vector<8x768xf32>
    %c0_8 = arith.constant 0 : index
    %c0_9 = arith.constant 0 : index
    %5 = vector.load %arg6[%c0_8, %c0_9] : memref<1x768xf32, #tpu.memory_space<vmem>>, vector<1x768xf32>
    %6 = vector.broadcast %5 : vector<1x768xf32> to vector<8x768xf32>
    %7 = arith.addf %4, %6 : vector<8x768xf32>
    %c0_10 = arith.constant 0 : index
    %c0_11 = arith.constant 0 : index
    %8 = vector.load %arg5[%c0_10, %c0_11] : memref<256x768xf32, #tpu.memory_space<vmem>>, vector<256x768xf32>
    %cst_12 = arith.constant dense<0.000000e+00> : vector<8x768xf32>
    %9 = tpu.matmul %1, %8, %cst_12 {dimension_numbers = #tpu.dot_dimension_numbers<[1], [0], [0], [1], [0, 0, 1, 1], [], []>} : vector<8x256xf32>, vector<256x768xf32>, vector<8x768xf32> -> vector<8x768xf32>
    %c0_13 = arith.constant 0 : index
    %c0_14 = arith.constant 0 : index
    %10 = vector.load %arg7[%c0_13, %c0_14] : memref<1x768xf32, #tpu.memory_space<vmem>>, vector<1x768xf32>
    %11 = vector.broadcast %10 : vector<1x768xf32> to vector<8x768xf32>
    %12 = arith.addf %9, %11 : vector<8x768xf32>
    %13 = vector.extract_strided_slice %7 {offsets = [0, 0], sizes = [8, 384], strides = [1, 1]} : vector<8x768xf32> to vector<8x384xf32>
    %14 = vector.extract_strided_slice %12 {offsets = [0, 0], sizes = [8, 384], strides = [1, 1]} : vector<8x768xf32> to vector<8x384xf32>
    %15 = vector.extract_strided_slice %1 {offsets = [0, 0], sizes = [8, 128], strides = [1, 1]} : vector<8x256xf32> to vector<8x128xf32>
    %16 = vector.extract_strided_slice %13 {offsets = [0, 0], sizes = [8, 128], strides = [1, 1]} : vector<8x384xf32> to vector<8x128xf32>
    %17 = vector.extract_strided_slice %14 {offsets = [0, 0], sizes = [8, 128], strides = [1, 1]} : vector<8x384xf32> to vector<8x128xf32>
    %18 = arith.addf %16, %17 : vector<8x128xf32>
    %19 = arith.negf %18 : vector<8x128xf32>
    %20 = math.exp %19 : vector<8x128xf32>
    %cst_15 = arith.constant 1.000000e+00 : f32
    %21 = vector.broadcast %cst_15 : f32 to vector<8x128xf32>
    %22 = arith.addf %21, %20 : vector<8x128xf32>
    %23 = arith.divf %21, %22 : vector<8x128xf32>
    %24 = vector.extract_strided_slice %13 {offsets = [0, 128], sizes = [8, 128], strides = [1, 1]} : vector<8x384xf32> to vector<8x128xf32>
    %25 = vector.extract_strided_slice %14 {offsets = [0, 128], sizes = [8, 128], strides = [1, 1]} : vector<8x384xf32> to vector<8x128xf32>
    %26 = arith.addf %24, %25 : vector<8x128xf32>
    %27 = arith.negf %26 : vector<8x128xf32>
    %28 = math.exp %27 : vector<8x128xf32>
    %cst_16 = arith.constant 1.000000e+00 : f32
    %29 = vector.broadcast %cst_16 : f32 to vector<8x128xf32>
    %30 = arith.addf %29, %28 : vector<8x128xf32>
    %31 = arith.divf %29, %30 : vector<8x128xf32>
    %32 = vector.extract_strided_slice %13 {offsets = [0, 256], sizes = [8, 128], strides = [1, 1]} : vector<8x384xf32> to vector<8x128xf32>
    %33 = vector.extract_strided_slice %14 {offsets = [0, 256], sizes = [8, 128], strides = [1, 1]} : vector<8x384xf32> to vector<8x128xf32>
    %34 = arith.mulf %23, %33 : vector<8x128xf32>
    %35 = arith.addf %32, %34 : vector<8x128xf32>
    %36 = math.tanh %35 : vector<8x128xf32>
    %cst_17 = arith.constant 1.000000e+00 : f32
    %37 = vector.broadcast %cst_17 : f32 to vector<8x128xf32>
    %38 = arith.subf %37, %31 : vector<8x128xf32>
    %39 = arith.mulf %38, %36 : vector<8x128xf32>
    %40 = arith.mulf %31, %15 : vector<8x128xf32>
    %41 = arith.addf %39, %40 : vector<8x128xf32>
    %42 = vector.extract_strided_slice %7 {offsets = [0, 384], sizes = [8, 384], strides = [1, 1]} : vector<8x768xf32> to vector<8x384xf32>
    %43 = vector.extract_strided_slice %12 {offsets = [0, 384], sizes = [8, 384], strides = [1, 1]} : vector<8x768xf32> to vector<8x384xf32>
    %44 = vector.extract_strided_slice %1 {offsets = [0, 128], sizes = [8, 128], strides = [1, 1]} : vector<8x256xf32> to vector<8x128xf32>
    %45 = vector.extract_strided_slice %42 {offsets = [0, 0], sizes = [8, 128], strides = [1, 1]} : vector<8x384xf32> to vector<8x128xf32>
    %46 = vector.extract_strided_slice %43 {offsets = [0, 0], sizes = [8, 128], strides = [1, 1]} : vector<8x384xf32> to vector<8x128xf32>
    %47 = arith.addf %45, %46 : vector<8x128xf32>
    %48 = arith.negf %47 : vector<8x128xf32>
    %49 = math.exp %48 : vector<8x128xf32>
    %cst_18 = arith.constant 1.000000e+00 : f32
    %50 = vector.broadcast %cst_18 : f32 to vector<8x128xf32>
    %51 = arith.addf %50, %49 : vector<8x128xf32>
    %52 = arith.divf %50, %51 : vector<8x128xf32>
    %53 = vector.extract_strided_slice %42 {offsets = [0, 128], sizes = [8, 128], strides = [1, 1]} : vector<8x384xf32> to vector<8x128xf32>
    %54 = vector.extract_strided_slice %43 {offsets = [0, 128], sizes = [8, 128], strides = [1, 1]} : vector<8x384xf32> to vector<8x128xf32>
    %55 = arith.addf %53, %54 : vector<8x128xf32>
    %56 = arith.negf %55 : vector<8x128xf32>
    %57 = math.exp %56 : vector<8x128xf32>
    %cst_19 = arith.constant 1.000000e+00 : f32
    %58 = vector.broadcast %cst_19 : f32 to vector<8x128xf32>
    %59 = arith.addf %58, %57 : vector<8x128xf32>
    %60 = arith.divf %58, %59 : vector<8x128xf32>
    %61 = vector.extract_strided_slice %42 {offsets = [0, 256], sizes = [8, 128], strides = [1, 1]} : vector<8x384xf32> to vector<8x128xf32>
    %62 = vector.extract_strided_slice %43 {offsets = [0, 256], sizes = [8, 128], strides = [1, 1]} : vector<8x384xf32> to vector<8x128xf32>
    %63 = arith.mulf %52, %62 : vector<8x128xf32>
    %64 = arith.addf %61, %63 : vector<8x128xf32>
    %65 = math.tanh %64 : vector<8x128xf32>
    %cst_20 = arith.constant 1.000000e+00 : f32
    %66 = vector.broadcast %cst_20 : f32 to vector<8x128xf32>
    %67 = arith.subf %66, %60 : vector<8x128xf32>
    %68 = arith.mulf %67, %65 : vector<8x128xf32>
    %69 = arith.mulf %60, %44 : vector<8x128xf32>
    %70 = arith.addf %68, %69 : vector<8x128xf32>
    %71 = tpu.concatenate %41, %70 in 1 : vector<8x128xf32>, vector<8x128xf32> -> vector<8x256xf32>
    %c0_21 = arith.constant 0 : index
    %c0_22 = arith.constant 0 : index
    %72 = vector.load %arg11[%c0_21, %c0_22] : memref<8x256xf32, #tpu.memory_space<vmem>>, vector<8x256xf32>
    tpu.vector_store %arg11[%c0_21, %c0_22], %71 {strides = array<i32>} : memref<8x256xf32, #tpu.memory_space<vmem>>, vector<8x256xf32>,
    %73 = arith.addf %41, %70 : vector<8x128xf32>
    %74 = vector.shape_cast %73 : vector<8x128xf32> to vector<8x1x128xf32>
    %75 = vector.broadcast %74 : vector<8x1x128xf32> to vector<8x8x128xf32>
    %76 = arith.mulf %75, %2 : vector<8x8x128xf32>
    %cst_23 = arith.constant dense<0.000000e+00> : vector<8x8xf32>
    %77 = vector.multi_reduction <add>, %76, %cst_23 [2] : vector<8x8x128xf32> to vector<8x8xf32>
    %cst_24 = arith.constant dense<0xFF800000> : vector<8xf32>
    %78 = vector.multi_reduction <maximumf>, %77, %cst_24 [1] : vector<8x8xf32> to vector<8xf32>
    %79 = vector.shape_cast %78 : vector<8xf32> to vector<8x1xf32>
    %80 = vector.broadcast %79 : vector<8x1xf32> to vector<8x8xf32>
    %81 = arith.subf %77, %80 : vector<8x8xf32>
    %82 = math.exp %81 : vector<8x8xf32>
    %cst_25 = arith.constant dense<0.000000e+00> : vector<8xf32>
    %83 = vector.multi_reduction <add>, %82, %cst_25 [1] : vector<8x8xf32> to vector<8xf32>
    %84 = vector.shape_cast %83 : vector<8xf32> to vector<8x1xf32>
    %85 = tpu.reciprocal %84 {approx = true} : vector<8x1xf32> -> vector<8x1xf32>
    %86 = vector.broadcast %85 : vector<8x1xf32> to vector<8x8xf32>
    %87 = arith.mulf %82, %86 : vector<8x8xf32>
    %88 = vector.shape_cast %87 : vector<8x8xf32> to vector<8x8x1xf32>
    %89 = vector.broadcast %88 : vector<8x8x1xf32> to vector<8x8x128xf32>
    %90 = arith.mulf %89, %2 : vector<8x8x128xf32>
    %cst_26 = arith.constant dense<0.000000e+00> : vector<8x128xf32>
    %91 = vector.multi_reduction <add>, %90, %cst_26 [1] : vector<8x8x128xf32> to vector<8x128xf32>
    %c0_27 = arith.constant 0 : index
    %c0_28 = arith.constant 0 : index
    %92 = vector.load %arg8[%c0_27, %c0_28] : memref<128x128xf32, #tpu.memory_space<vmem>>, vector<128x128xf32>
    %cst_29 = arith.constant dense<0.000000e+00> : vector<8x128xf32>
    %93 = tpu.matmul %91, %92, %cst_29 {dimension_numbers = #tpu.dot_dimension_numbers<[1], [0], [0], [1], [0, 0, 1, 1], [], []>} : vector<8x128xf32>, vector<128x128xf32>, vector<8x128xf32> -> vector<8x128xf32>
    %c0_30 = arith.constant 0 : index
    %c0_31 = arith.constant 0 : index
    %94 = vector.load %arg9[%c0_30, %c0_31] : memref<1x128xf32, #tpu.memory_space<vmem>>, vector<1x128xf32>
    %95 = vector.broadcast %94 : vector<1x128xf32> to vector<8x128xf32>
    %96 = arith.addf %93, %95 : vector<8x128xf32>
    %97 = tpu.iota {dimensions = array<i32: 1>} : vector<8x128xi32>
    %c40_i32 = arith.constant 40 : i32
    %98 = vector.broadcast %c40_i32 : i32 to vector<8x128xi32>
    %99 = arith.cmpi slt, %97, %98 : vector<8x128xi32>
    %cst_32 = arith.constant -1.000000e+30 : f32
    %100 = vector.broadcast %cst_32 : f32 to vector<8x128xf32>
    %101 = arith.select %99, %96, %100 : vector<8x128xi1>, vector<8x128xf32>
    %cst_33 = arith.constant dense<0xFF800000> : vector<8xf32>
    %102 = vector.multi_reduction <maximumf>, %101, %cst_33 [1] : vector<8x128xf32> to vector<8xf32>
    %103 = vector.shape_cast %102 : vector<8xf32> to vector<8x1xf32>
    %104 = vector.broadcast %103 : vector<8x1xf32> to vector<8x128xf32>
    %105 = arith.subf %101, %104 : vector<8x128xf32>
    %106 = math.exp %105 : vector<8x128xf32>
    %cst_34 = arith.constant dense<0.000000e+00> : vector<8xf32>
    %107 = vector.multi_reduction <add>, %106, %cst_34 [1] : vector<8x128xf32> to vector<8xf32>
    %108 = vector.shape_cast %107 : vector<8xf32> to vector<8x1xf32>
    %109 = tpu.reciprocal %108 {approx = true} : vector<8x1xf32> -> vector<8x1xf32>
    %110 = vector.broadcast %109 : vector<8x1xf32> to vector<8x128xf32>
    %111 = arith.mulf %106, %110 : vector<8x128xf32>
    %c0_35 = arith.constant 0 : index
    %c0_36 = arith.constant 0 : index
    %112 = vector.load %arg10[%c0_35, %c0_36] : memref<8x128xf32, #tpu.memory_space<vmem>>, vector<8x128xf32>
    tpu.vector_store %arg10[%c0_35, %c0_36], %111 {strides = array<i32>} : memref<8x128xf32, #tpu.memory_space<vmem>>, vector<8x128xf32>,
    return
  }
  func.func @transform_0(%arg0: i32) -> (i32, i32) {
    %c0_i32 = arith.constant 0 : i32
    %c0_i32_0 = arith.constant 0 : i32
    return %arg0, %c0_i32 : i32, i32
  }
  func.func @transform_1(%arg0: i32) -> (i32, i32) {
    %c0_i32 = arith.constant 0 : i32
    %c0_i32_0 = arith.constant 0 : i32
    return %arg0, %c0_i32 : i32, i32
  }
  func.func @transform_2(%arg0: i32) -> (i32, i32, i32) {
    %c0_i32 = arith.constant 0 : i32
    %c0_i32_0 = arith.constant 0 : i32
    %c0_i32_1 = arith.constant 0 : i32
    return %arg0, %c0_i32, %c0_i32_0 : i32, i32, i32
  }
  func.func @transform_3(%arg0: i32) -> (i32, i32) {
    %c0_i32 = arith.constant 0 : i32
    %c0_i32_0 = arith.constant 0 : i32
    %c0_i32_1 = arith.constant 0 : i32
    return %c0_i32, %c0_i32_0 : i32, i32
  }
  func.func @transform_4(%arg0: i32) -> (i32, i32) {
    %c0_i32 = arith.constant 0 : i32
    %c0_i32_0 = arith.constant 0 : i32
    %c0_i32_1 = arith.constant 0 : i32
    return %c0_i32, %c0_i32_0 : i32, i32
  }
  func.func @transform_5(%arg0: i32) -> (i32, i32) {
    %c0_i32 = arith.constant 0 : i32
    %c0_i32_0 = arith.constant 0 : i32
    %c0_i32_1 = arith.constant 0 : i32
    return %c0_i32, %c0_i32_0 : i32, i32
  }
  func.func @transform_6(%arg0: i32) -> (i32, i32) {
    %c0_i32 = arith.constant 0 : i32
    %c0_i32_0 = arith.constant 0 : i32
    %c0_i32_1 = arith.constant 0 : i32
    return %c0_i32, %c0_i32_0 : i32, i32
  }
  func.func @transform_7(%arg0: i32) -> (i32, i32) {
    %c0_i32 = arith.constant 0 : i32
    %c0_i32_0 = arith.constant 0 : i32
    %c0_i32_1 = arith.constant 0 : i32
    return %c0_i32, %c0_i32_0 : i32, i32
  }
  func.func @transform_8(%arg0: i32) -> (i32, i32) {
    %c0_i32 = arith.constant 0 : i32
    %c0_i32_0 = arith.constant 0 : i32
    %c0_i32_1 = arith.constant 0 : i32
    return %c0_i32, %c0_i32_0 : i32, i32
  }
  func.func @transform_9(%arg0: i32) -> (i32, i32) {
    %c0_i32 = arith.constant 0 : i32
    %c0_i32_0 = arith.constant 0 : i32
    return %arg0, %c0_i32 : i32, i32
  }
  func.func @transform_10(%arg0: i32) -> (i32, i32) {
    %c0_i32 = arith.constant 0 : i32
    %c0_i32_0 = arith.constant 0 : i32
    return %arg0, %c0_i32 : i32, i32
  }
}

</mosaic_0001>

<llo_original>
// kernel: decoder_forward.1
$region0: #{decoder_forward.1}
  #allocation0 [shape = 'u32[]', space=smem, size = 0x4, offset = 0x4, fixed_abs, tag = 'smem constant byte address 0x4 - core index']
  #allocation1 [shape = 'u32[144,128]{1,0:T(1,128)}', space=vmem, size = 0x12000, scoped, tag = 'internal scratch']
  %s0 = inlined_call_operand.vmem [shape: f32[8,128], index: 0, kind: input, shape index: {}]
  %s1 = inlined_call_operand.vmem [shape: f32[8,256], index: 1, kind: input, shape index: {}]
  %s2 = inlined_call_operand.vmem [shape: f32[8,8,128], index: 2, kind: input, shape index: {}]
  %s3 = inlined_call_operand.hbm [shape: f32[128,768], index: 3, kind: input, shape index: {}]
  %s4 = inlined_call_operand.hbm [shape: f32[256,768], index: 4, kind: input, shape index: {}]
  %s5 = inlined_call_operand.vmem [shape: f32[1,768], index: 5, kind: input, shape index: {}]
  %s6 = inlined_call_operand.vmem [shape: f32[1,768], index: 6, kind: input, shape index: {}]
  %s7 = inlined_call_operand.vmem [shape: f32[128,128], index: 7, kind: input, shape index: {}]
  %s8 = inlined_call_operand.vmem [shape: f32[1,128], index: 8, kind: input, shape index: {}]
  %s9 = inlined_call_operand.vmem [shape: f32[8,128], index: 9, kind: output, shape index: {0}]
  %s10 = inlined_call_operand.vmem [shape: f32[8,256], index: 10, kind: output, shape index: {1}]
  %11 = xla_tuple %s9, %s10
  %s12 = sld [smem:[#allocation0]]
  $region62: #{decoder_forward.1} parent=0
    _
  %s14 = ssub.s32 1, %s12
  %s15 = scalar_select 0, %s14, %s12
  $region1: #{decoder_forward.1} parent=0
    #allocation2 [shape = 'u8[393216]{0}', space=vmem, size = 0x60000, scoped, tag = 'input window, operand 3, single buffered']
    #allocation3 [shape = 's32[1]{0}', space=sflag, size = 0x4, scoped, tag = 'scoped memory for decoder_forward.1']
    #allocation4 [shape = 'u8[786432]{0}', space=vmem, size = 0xc0000, scoped, tag = 'input window, operand 4, single buffered']
    #allocation5 [shape = 's32[1]{0}', space=sflag, size = 0x4, scoped, tag = 'scoped memory for decoder_forward.1']
    %16 = vsyncpa [#allocation3], 0
    %17 = vsyncpa [#allocation5], 0
    // Predicated region
    $region2: #{decoder_forward.1} parent=1 // pred_check
      _
    $region3: #{decoder_forward.1} parent=1 // pred_check_branch
      %19 = sbr.rel (0) target = $region5
    $region4: #{decoder_forward.1} parent=1 // pred_region
      _
    $region5: #{decoder_forward.1} parent=1 // pred_fallthru
      _
    // Predicated region
    $region6: #{decoder_forward.1} parent=1 // pred_check
      _
    $region7: #{decoder_forward.1} parent=1 // pred_check_branch
      %21 = sbr.rel (0) target = $region9
    $region8: #{decoder_forward.1} parent=1 // pred_region
      _
    $region9: #{decoder_forward.1} parent=1 // pred_fallthru
      _
    // Predicated region
    $region10: #{decoder_forward.1} parent=1 // pred_check
      _
    $region11: #{decoder_forward.1} parent=1 // pred_check_branch
      %23 = sbr.rel (0) target = $region13
    $region12: #{decoder_forward.1} parent=1 // pred_region
      _
    $region13: #{decoder_forward.1} parent=1 // pred_fallthru
      _
    // Predicated region
    $region14: #{decoder_forward.1} parent=1 // pred_check
      _
    $region15: #{decoder_forward.1} parent=1 // pred_check_branch
      %25 = sbr.rel (0) target = $region17
    $region16: #{decoder_forward.1} parent=1 // pred_region
      %s27 = ssub.s32 12288, 12288
      %28 = vsyncadd [#allocation3], %s27
      %s29 = sshll.u32 [#allocation2], 4
      %s30 = int_to_ptr.vmem [resolvable:$true] %s29
      %35 = dma.hbm_to_vmem [thread:$0]  %s3, 12288, %s30, [#allocation3], 768, 768, 48
    $region17: #{decoder_forward.1} parent=1 // pred_fallthru
      _
    // Predicated region
    $region18: #{decoder_forward.1} parent=1 // pred_check
      _
    $region19: #{decoder_forward.1} parent=1 // pred_check_branch
      %37 = sbr.rel (0) target = $region21
    $region20: #{decoder_forward.1} parent=1 // pred_region
      %s39 = ssub.s32 24576, 24576
      %40 = vsyncadd [#allocation5], %s39
      %s41 = sshll.u32 [#allocation4], 4
      %s42 = int_to_ptr.vmem [resolvable:$true] %s41
      %47 = dma.hbm_to_vmem [thread:$0]  %s4, 24576, %s42, [#allocation5], 768, 768, 48
    $region21: #{decoder_forward.1} parent=1 // pred_fallthru
      _
    // Predicated region
    $region22: #{decoder_forward.1} parent=1 // pred_check
      _
    $region23: #{decoder_forward.1} parent=1 // pred_check_branch
      %49 = sbr.rel (0) target = $region25
    $region24: #{decoder_forward.1} parent=1 // pred_region
      _
    $region25: #{decoder_forward.1} parent=1 // pred_fallthru
      _
    // Predicated region
    $region26: #{decoder_forward.1} parent=1 // pred_check
      _
    $region27: #{decoder_forward.1} parent=1 // pred_check_branch
      %51 = sbr.rel (0) target = $region29
    $region28: #{decoder_forward.1} parent=1 // pred_region
      _
    $region29: #{decoder_forward.1} parent=1 // pred_fallthru
      _
    // Predicated region
    $region30: #{decoder_forward.1} parent=1 // pred_check
      _
    $region31: #{decoder_forward.1} parent=1 // pred_check_branch
      %53 = sbr.rel (0) target = $region33
    $region32: #{decoder_forward.1} parent=1 // pred_region
      _
    $region33: #{decoder_forward.1} parent=1 // pred_fallthru
      _
    // Predicated region
    $region34: #{decoder_forward.1} parent=1 // pred_check
      _
    $region35: #{decoder_forward.1} parent=1 // pred_check_branch
      %55 = sbr.rel (0) target = $region37
    $region36: #{decoder_forward.1} parent=1 // pred_region
      _
    $region37: #{decoder_forward.1} parent=1 // pred_fallthru
      _
    // Predicated region
    $region38: #{decoder_forward.1} parent=1 // pred_check
      _
    $region39: #{decoder_forward.1} parent=1 // pred_check_branch
      %57 = sbr.rel (0) target = $region41
    $region40: #{decoder_forward.1} parent=1 // pred_region
      %58 = dma.done [#allocation3], 12288
    $region41: #{decoder_forward.1} parent=1 // pred_fallthru
      _
    // Predicated region
    $region42: #{decoder_forward.1} parent=1 // pred_check
      _
    $region43: #{decoder_forward.1} parent=1 // pred_check_branch
      %60 = sbr.rel (0) target = $region45
    $region44: #{decoder_forward.1} parent=1 // pred_region
      %61 = dma.done [#allocation5], 24576
    $region45: #{decoder_forward.1} parent=1 // pred_fallthru
      _
    %v62 = vld [vmem:[%s0] sm:$0xff]
    %v63 = vld [vmem:[%s1] sm:$0xff]
    %v64 = vld [vmem:[%s1 + $0x8] sm:$0xff]
    %v65 = vld [vmem:[%s2] sm:$0xff]
    %v66 = vld [vmem:[%s2 + $0x8] sm:$0xff]
    %v67 = vld [vmem:[%s2 + $0x10] sm:$0xff]
    %v68 = vld [vmem:[%s2 + $0x18] sm:$0xff]
    %v69 = vld [vmem:[%s2 + $0x20] sm:$0xff]
    %v70 = vld [vmem:[%s2 + $0x28] sm:$0xff]
    %v71 = vld [vmem:[%s2 + $0x30] sm:$0xff]
    %v72 = vld [vmem:[%s2 + $0x38] sm:$0xff]
    %v73 = vld [vmem:[#allocation2] sm:$0xff]
    %v74 = vld [vmem:[#allocation2 + $0x8] sm:$0xff]
    %v75 = vld [vmem:[#allocation2 + $0x10] sm:$0xff]
    %v76 = vld [vmem:[#allocation2 + $0x18] sm:$0xff]
    %v77 = vld [vmem:[#allocation2 + $0x20] sm:$0xff]
    %v78 = vld [vmem:[#allocation2 + $0x28] sm:$0xff]
    %v79 = vld [vmem:[#allocation2 + $0x30] sm:$0xff]
    %v80 = vld [vmem:[#allocation2 + $0x38] sm:$0xff]
    %v81 = vld [vmem:[#allocation2 + $0x40] sm:$0xff]
    %v82 = vld [vmem:[#allocation2 + $0x48] sm:$0xff]
    %v83 = vld [vmem:[#allocation2 + $0x50] sm:$0xff]
    %v84 = vld [vmem:[#allocation2 + $0x58] sm:$0xff]
    %v85 = vld [vmem:[#allocation2 + $0x60] sm:$0xff]
    %v86 = vld [vmem:[#allocation2 + $0x68] sm:$0xff]
    %v87 = vld [vmem:[#allocation2 + $0x70] sm:$0xff]
    %v88 = vld [vmem:[#allocation2 + $0x78] sm:$0xff]
    %v89 = vld [vmem:[#allocation2 + $0x80] sm:$0xff]
    %v90 = vld [vmem:[#allocation2 + $0x88] sm:$0xff]
    %v91 = vld [vmem:[#allocation2 + $0x90] sm:$0xff]
    %v92 = vld [vmem:[#allocation2 + $0x98] sm:$0xff]
    %v93 = vld [vmem:[#allocation2 + $0xa0] sm:$0xff]
    %v94 = vld [vmem:[#allocation2 + $0xa8] sm:$0xff]
    %v95 = vld [vmem:[#allocation2 + $0xb0] sm:$0xff]
    %v96 = vld [vmem:[#allocation2 + $0xb8] sm:$0xff]
    %v97 = vld [vmem:[#allocation2 + $0xc0] sm:$0xff]
    %v98 = vld [vmem:[#allocation2 + $0xc8] sm:$0xff]
    %v99 = vld [vmem:[#allocation2 + $0xd0] sm:$0xff]
    %v100 = vld [vmem:[#allocation2 + $0xd8] sm:$0xff]
    %v101 = vld [vmem:[#allocation2 + $0xe0] sm:$0xff]
    %v102 = vld [vmem:[#allocation2 + $0xe8] sm:$0xff]
    %v103 = vld [vmem:[#allocation2 + $0xf0] sm:$0xff]
    %v104 = vld [vmem:[#allocation2 + $0xf8] sm:$0xff]
    %v105 = vld [vmem:[#allocation2 + $0x100] sm:$0xff]
    %v106 = vld [vmem:[#allocation2 + $0x108] sm:$0xff]
    %v107 = vld [vmem:[#allocation2 + $0x110] sm:$0xff]
    %v108 = vld [vmem:[#allocation2 + $0x118] sm:$0xff]
    %v109 = vld [vmem:[#allocation2 + $0x120] sm:$0xff]
    %v110 = vld [vmem:[#allocation2 + $0x128] sm:$0xff]
    %v111 = vld [vmem:[#allocation2 + $0x130] sm:$0xff]
    %v112 = vld [vmem:[#allocation2 + $0x138] sm:$0xff]
    %v113 = vld [vmem:[#allocation2 + $0x140] sm:$0xff]
    %v114 = vld [vmem:[#allocation2 + $0x148] sm:$0xff]
    %v115 = vld [vmem:[#allocation2 + $0x150] sm:$0xff]
    %v116 = vld [vmem:[#allocation2 + $0x158] sm:$0xff]
    %v117 = vld [vmem:[#allocation2 + $0x160] sm:$0xff]
    %v118 = vld [vmem:[#allocation2 + $0x168] sm:$0xff]
    %v119 = vld [vmem:[#allocation2 + $0x170] sm:$0xff]
    %v120 = vld [vmem:[#allocation2 + $0x178] sm:$0xff]
    %v121 = vld [vmem:[#allocation2 + $0x180] sm:$0xff]
    %v122 = vld [vmem:[#allocation2 + $0x188] sm:$0xff]
    %v123 = vld [vmem:[#allocation2 + $0x190] sm:$0xff]
    %v124 = vld [vmem:[#allocation2 + $0x198] sm:$0xff]
    %v125 = vld [vmem:[#allocation2 + $0x1a0] sm:$0xff]
    %v126 = vld [vmem:[#allocation2 + $0x1a8] sm:$0xff]
    %v127 = vld [vmem:[#allocation2 + $0x1b0] sm:$0xff]
    %v128 = vld [vmem:[#allocation2 + $0x1b8] sm:$0xff]
    %v129 = vld [vmem:[#allocation2 + $0x1c0] sm:$0xff]
    %v130 = vld [vmem:[#allocation2 + $0x1c8] sm:$0xff]
    %v131 = vld [vmem:[#allocation2 + $0x1d0] sm:$0xff]
    %v132 = vld [vmem:[#allocation2 + $0x1d8] sm:$0xff]
    %v133 = vld [vmem:[#allocation2 + $0x1e0] sm:$0xff]
    %v134 = vld [vmem:[#allocation2 + $0x1e8] sm:$0xff]
    %v135 = vld [vmem:[#allocation2 + $0x1f0] sm:$0xff]
    %v136 = vld [vmem:[#allocation2 + $0x1f8] sm:$0xff]
    %v137 = vld [vmem:[#allocation2 + $0x200] sm:$0xff]
    %v138 = vld [vmem:[#allocation2 + $0x208] sm:$0xff]
    %v139 = vld [vmem:[#allocation2 + $0x210] sm:$0xff]
    %v140 = vld [vmem:[#allocation2 + $0x218] sm:$0xff]
    %v141 = vld [vmem:[#allocation2 + $0x220] sm:$0xff]
    %v142 = vld [vmem:[#allocation2 + $0x228] sm:$0xff]
    %v143 = vld [vmem:[#allocation2 + $0x230] sm:$0xff]
    %v144 = vld [vmem:[#allocation2 + $0x238] sm:$0xff]
    %v145 = vld [vmem:[#allocation2 + $0x240] sm:$0xff]
    %v146 = vld [vmem:[#allocation2 + $0x248] sm:$0xff]
    %v147 = vld [vmem:[#allocation2 + $0x250] sm:$0xff]
    %v148 = vld [vmem:[#allocation2 + $0x258] sm:$0xff]
    %v149 = vld [vmem:[#allocation2 + $0x260] sm:$0xff]
    %v150 = vld [vmem:[#allocation2 + $0x268] sm:$0xff]
    %v151 = vld [vmem:[#allocation2 + $0x270] sm:$0xff]
    %v152 = vld [vmem:[#allocation2 + $0x278] sm:$0xff]
    %v153 = vld [vmem:[#allocation2 + $0x280] sm:$0xff]
    %v154 = vld [vmem:[#allocation2 + $0x288] sm:$0xff]
    %v155 = vld [vmem:[#allocation2 + $0x290] sm:$0xff]
    %v156 = vld [vmem:[#allocation2 + $0x298] sm:$0xff]
    %v157 = vld [vmem:[#allocation2 + $0x2a0] sm:$0xff]
    %v158 = vld [vmem:[#allocation2 + $0x2a8] sm:$0xff]
    %v159 = vld [vmem:[#allocation2 + $0x2b0] sm:$0xff]
    %v160 = vld [vmem:[#allocation2 + $0x2b8] sm:$0xff]
    %v161 = vld [vmem:[#allocation2 + $0x2c0] sm:$0xff]
    %v162 = vld [vmem:[#allocation2 + $0x2c8] sm:$0xff]
    %v163 = vld [vmem:[#allocation2 + $0x2d0] sm:$0xff]
    %v164 = vld [vmem:[#allocation2 + $0x2d8] sm:$0xff]
    %v165 = vld [vmem:[#allocation2 + $0x2e0] sm:$0xff]
    %v166 = vld [vmem:[#allocation2 + $0x2e8] sm:$0xff]
    %v167 = vld [vmem:[#allocation2 + $0x2f0] sm:$0xff]
    %v168 = vld [vmem:[#allocation2 + $0x2f8] sm:$0xff]
    %v169 = vld [vmem:[%s5] sm:$0x3f]
    %v171 = vlaneseq
    %v172 = vshrl.u32 %v171, 7
    %v173 = vsub.s32 0, %v172
    %v174 = vrot.slane %v169, %v173
    %v175 = vlaneseq
    %v176 = vshrl.u32 %v175, 7
    %v177 = vsub.s32 1, %v176
    %v178 = vrot.slane %v169, %v177
    %v179 = vlaneseq
    %v180 = vshrl.u32 %v179, 7
    %v181 = vsub.s32 2, %v180
    %v182 = vrot.slane %v169, %v181
    %v183 = vlaneseq
    %v184 = vshrl.u32 %v183, 7
    %v185 = vsub.s32 3, %v184
    %v186 = vrot.slane %v169, %v185
    %v187 = vlaneseq
    %v188 = vshrl.u32 %v187, 7
    %v189 = vsub.s32 4, %v188
    %v190 = vrot.slane %v169, %v189
    %v191 = vlaneseq
    %v192 = vshrl.u32 %v191, 7
    %v193 = vsub.s32 5, %v192
    %v194 = vrot.slane %v169, %v193
    %201 = vmatprep.subr.mxu0 %v164
    %202 = vmatpush1.msra.mxu0 %v163
    %203 = vmatprep.subr.mxu0 %v158
    %204 = vmatpush1.msra.mxu0 %v157
    %205 = vmatprep.subr.mxu0 %v152
    %206 = vmatpush1.msra.mxu0 %v151
    %207 = vmatprep.subr.mxu0 %v146
    %208 = vmatpush1.msra.mxu0 %v145
    %209 = vmatprep.subr.mxu0 %v140
    %210 = vmatpush1.msra.mxu0 %v139
    %211 = vmatprep.subr.mxu0 %v134
    %212 = vmatpush1.msra.mxu0 %v133
    %213 = vmatprep.subr.mxu0 %v128
    %214 = vmatpush1.msra.mxu0 %v127
    %215 = vmatprep.subr.mxu0 %v122
    %216 = vmatpush1.msra.mxu0 %v121
    %217 = vmatprep.subr.mxu0 %v116
    %218 = vmatpush1.msra.mxu0 %v115
    %219 = vmatprep.subr.mxu0 %v110
    %220 = vmatpush1.msra.mxu0 %v109
    %221 = vmatprep.subr.mxu0 %v104
    %222 = vmatpush1.msra.mxu0 %v103
    %223 = vmatprep.subr.mxu0 %v98
    %224 = vmatpush1.msra.mxu0 %v97
    %225 = vmatprep.subr.mxu0 %v92
    %226 = vmatpush1.msra.mxu0 %v91
    %227 = vmatprep.subr.mxu0 %v86
    %228 = vmatpush1.msra.mxu0 %v85
    %229 = vmatprep.subr.mxu0 %v80
    %230 = vmatpush1.msra.mxu0 %v79
    %231 = vmatprep.subr.mxu0 %v74
    %232 = vmatpush1.msra.mxu0 %v73
    %233 = vmatprep.subr.mxu0 0.0
    %234 = vmatpush2.msra.mxu0 0.0
    %235 = vmatprep.subr.mxu0 0.0
    %236 = vmatpush2.msra.mxu0 0.0
    %237 = vmatprep.subr.mxu0 0.0
    %238 = vmatpush2.msra.mxu0 0.0
    %239 = vmatprep.subr.mxu0 0.0
    %240 = vmatpush2.msra.mxu0 0.0
    %241 = vmatprep.subr.mxu0 0.0
    %242 = vmatpush2.msra.mxu0 0.0
    %243 = vmatprep.subr.mxu0 0.0
    %244 = vmatpush2.msra.mxu0 0.0
    %245 = vmatprep.subr.mxu0 0.0
    %246 = vmatpush2.msra.mxu0 0.0
    %247 = vmatprep.subr.mxu0 0.0
    %248 = vmatpush2.msra.mxu0 0.0
    %249 = vmatprep.subr.mxu0 0.0
    %250 = vmatpush2.msra.mxu0 0.0
    %251 = vmatprep.subr.mxu0 0.0
    %252 = vmatpush2.msra.mxu0 0.0
    %253 = vmatprep.subr.mxu0 0.0
    %254 = vmatpush2.msra.mxu0 0.0
    %255 = vmatprep.subr.mxu0 0.0
    %256 = vmatpush2.msra.mxu0 0.0
    %257 = vmatprep.subr.mxu0 0.0
    %258 = vmatpush2.msra.mxu0 0.0
    %259 = vmatprep.subr.mxu0 0.0
    %260 = vmatpush2.msra.mxu0 0.0
    %261 = vmatprep.subr.mxu0 0.0
    %262 = vmatpush2.msra.mxu0 0.0
    %263 = vmatprep.subr.mxu0 0.0
    %264 = vmatpush2.msra.mxu0 0.0
    %265 = vmatprep.mubr.f32.mxu0 0.0
    %266 = vmatmul.mubr.f32.gmra.mxu0 %v62
    %v267 = vpop.f32.mrf.mxu0
    %v268 = vadd.f32 %v174, %v267
    %v269 = vpop.f32.mrf.mxu0
    %v270 = vadd.f32 %v178, %v269
    %271 = vdwg.mxu0
    %272 = vmatprep.subr.mxu0 %v166
    %273 = vmatpush1.msra.mxu0 %v165
    %274 = vmatprep.subr.mxu0 %v160
    %275 = vmatpush1.msra.mxu0 %v159
    %276 = vmatprep.subr.mxu0 %v154
    %277 = vmatpush1.msra.mxu0 %v153
    %278 = vmatprep.subr.mxu0 %v148
    %279 = vmatpush1.msra.mxu0 %v147
    %280 = vmatprep.subr.mxu0 %v142
    %281 = vmatpush1.msra.mxu0 %v141
    %282 = vmatprep.subr.mxu0 %v136
    %283 = vmatpush1.msra.mxu0 %v135
    %284 = vmatprep.subr.mxu0 %v130
    %285 = vmatpush1.msra.mxu0 %v129
    %286 = vmatprep.subr.mxu0 %v124
    %287 = vmatpush1.msra.mxu0 %v123
    %288 = vmatprep.subr.mxu0 %v118
    %289 = vmatpush1.msra.mxu0 %v117
    %290 = vmatprep.subr.mxu0 %v112
    %291 = vmatpush1.msra.mxu0 %v111
    %292 = vmatprep.subr.mxu0 %v106
    %293 = vmatpush1.msra.mxu0 %v105
    %294 = vmatprep.subr.mxu0 %v100
    %295 = vmatpush1.msra.mxu0 %v99
    %296 = vmatprep.subr.mxu0 %v94
    %297 = vmatpush1.msra.mxu0 %v93
    %298 = vmatprep.subr.mxu0 %v88
    %299 = vmatpush1.msra.mxu0 %v87
    %300 = vmatprep.subr.mxu0 %v82
    %301 = vmatpush1.msra.mxu0 %v81
    %302 = vmatprep.subr.mxu0 %v76
    %303 = vmatpush1.msra.mxu0 %v75
    %304 = vmatprep.subr.mxu0 0.0
    %305 = vmatpush2.msra.mxu0 0.0
    %306 = vmatprep.subr.mxu0 0.0
    %307 = vmatpush2.msra.mxu0 0.0
    %308 = vmatprep.subr.mxu0 0.0
    %309 = vmatpush2.msra.mxu0 0.0
    %310 = vmatprep.subr.mxu0 0.0
    %311 = vmatpush2.msra.mxu0 0.0
    %312 = vmatprep.subr.mxu0 0.0
    %313 = vmatpush2.msra.mxu0 0.0
    %314 = vmatprep.subr.mxu0 0.0
    %315 = vmatpush2.msra.mxu0 0.0
    %316 = vmatprep.subr.mxu0 0.0
    %317 = vmatpush2.msra.mxu0 0.0
    %318 = vmatprep.subr.mxu0 0.0
    %319 = vmatpush2.msra.mxu0 0.0
    %320 = vmatprep.subr.mxu0 0.0
    %321 = vmatpush2.msra.mxu0 0.0
    %322 = vmatprep.subr.mxu0 0.0
    %323 = vmatpush2.msra.mxu0 0.0
    %324 = vmatprep.subr.mxu0 0.0
    %325 = vmatpush2.msra.mxu0 0.0
    %326 = vmatprep.subr.mxu0 0.0
    %327 = vmatpush2.msra.mxu0 0.0
    %328 = vmatprep.subr.mxu0 0.0
    %329 = vmatpush2.msra.mxu0 0.0
    %330 = vmatprep.subr.mxu0 0.0
    %331 = vmatpush2.msra.mxu0 0.0
    %332 = vmatprep.subr.mxu0 0.0
    %333 = vmatpush2.msra.mxu0 0.0
    %334 = vmatprep.subr.mxu0 0.0
    %335 = vmatpush2.msra.mxu0 0.0
    %336 = vmatprep.mubr.f32.mxu0 0.0
    %337 = vmatmul.mubr.f32.gmra.mxu0 %v62
    %v338 = vpop.f32.mrf.mxu0
    %v339 = vadd.f32 %v182, %v338
    %v340 = vpop.f32.mrf.mxu0
    %v341 = vadd.f32 %v186, %v340
    %342 = vdwg.mxu0
    %343 = vmatprep.subr.mxu0 %v168
    %344 = vmatpush1.msra.mxu0 %v167
    %345 = vmatprep.subr.mxu0 %v162
    %346 = vmatpush1.msra.mxu0 %v161
    %347 = vmatprep.subr.mxu0 %v156
    %348 = vmatpush1.msra.mxu0 %v155
    %349 = vmatprep.subr.mxu0 %v150
    %350 = vmatpush1.msra.mxu0 %v149
    %351 = vmatprep.subr.mxu0 %v144
    %352 = vmatpush1.msra.mxu0 %v143
    %353 = vmatprep.subr.mxu0 %v138
    %354 = vmatpush1.msra.mxu0 %v137
    %355 = vmatprep.subr.mxu0 %v132
    %356 = vmatpush1.msra.mxu0 %v131
    %357 = vmatprep.subr.mxu0 %v126
    %358 = vmatpush1.msra.mxu0 %v125
    %359 = vmatprep.subr.mxu0 %v120
    %360 = vmatpush1.msra.mxu0 %v119
    %361 = vmatprep.subr.mxu0 %v114
    %362 = vmatpush1.msra.mxu0 %v113
    %363 = vmatprep.subr.mxu0 %v108
    %364 = vmatpush1.msra.mxu0 %v107
    %365 = vmatprep.subr.mxu0 %v102
    %366 = vmatpush1.msra.mxu0 %v101
    %367 = vmatprep.subr.mxu0 %v96
    %368 = vmatpush1.msra.mxu0 %v95
    %369 = vmatprep.subr.mxu0 %v90
    %370 = vmatpush1.msra.mxu0 %v89
    %371 = vmatprep.subr.mxu0 %v84
    %372 = vmatpush1.msra.mxu0 %v83
    %373 = vmatprep.subr.mxu0 %v78
    %374 = vmatpush1.msra.mxu0 %v77
    %375 = vmatprep.subr.mxu0 0.0
    %376 = vmatpush2.msra.mxu0 0.0
    %377 = vmatprep.subr.mxu0 0.0
    %378 = vmatpush2.msra.mxu0 0.0
    %379 = vmatprep.subr.mxu0 0.0
    %380 = vmatpush2.msra.mxu0 0.0
    %381 = vmatprep.subr.mxu0 0.0
    %382 = vmatpush2.msra.mxu0 0.0
    %383 = vmatprep.subr.mxu0 0.0
    %384 = vmatpush2.msra.mxu0 0.0
    %385 = vmatprep.subr.mxu0 0.0
    %386 = vmatpush2.msra.mxu0 0.0
    %387 = vmatprep.subr.mxu0 0.0
    %388 = vmatpush2.msra.mxu0 0.0
    %389 = vmatprep.subr.mxu0 0.0
    %390 = vmatpush2.msra.mxu0 0.0
    %391 = vmatprep.subr.mxu0 0.0
    %392 = vmatpush2.msra.mxu0 0.0
    %393 = vmatprep.subr.mxu0 0.0
    %394 = vmatpush2.msra.mxu0 0.0
    %395 = vmatprep.subr.mxu0 0.0
    %396 = vmatpush2.msra.mxu0 0.0
    %397 = vmatprep.subr.mxu0 0.0
    %398 = vmatpush2.msra.mxu0 0.0
    %399 = vmatprep.subr.mxu0 0.0
    %400 = vmatpush2.msra.mxu0 0.0
    %401 = vmatprep.subr.mxu0 0.0
    %402 = vmatpush2.msra.mxu0 0.0
    %403 = vmatprep.subr.mxu0 0.0
    %404 = vmatpush2.msra.mxu0 0.0
    %405 = vmatprep.subr.mxu0 0.0
    %406 = vmatpush2.msra.mxu0 0.0
    %407 = vmatprep.mubr.f32.mxu0 0.0
    %408 = vmatmul.mubr.f32.gmra.mxu0 %v62
    %v409 = vpop.f32.mrf.mxu0
    %v410 = vadd.f32 %v190, %v409
    %v411 = vpop.f32.mrf.mxu0
    %v412 = vadd.f32 %v194, %v411
    %413 = vdwg.mxu0
    %v414 = vld [vmem:[#allocation4] sm:$0xff]
    %v415 = vld [vmem:[#allocation4 + $0x8] sm:$0xff]
    %v416 = vld [vmem:[#allocation4 + $0x10] sm:$0xff]
    %v417 = vld [vmem:[#allocation4 + $0x18] sm:$0xff]
    %v418 = vld [vmem:[#allocation4 + $0x20] sm:$0xff]
    %v419 = vld [vmem:[#allocation4 + $0x28] sm:$0xff]
    %v420 = vld [vmem:[#allocation4 + $0x30] sm:$0xff]
    %v421 = vld [vmem:[#allocation4 + $0x38] sm:$0xff]
    %v422 = vld [vmem:[#allocation4 + $0x40] sm:$0xff]
    %v423 = vld [vmem:[#allocation4 + $0x48] sm:$0xff]
    %v424 = vld [vmem:[#allocation4 + $0x50] sm:$0xff]
    %v425 = vld [vmem:[#allocation4 + $0x58] sm:$0xff]
    %v426 = vld [vmem:[#allocation4 + $0x60] sm:$0xff]
    %v427 = vld [vmem:[#allocation4 + $0x68] sm:$0xff]
    %v428 = vld [vmem:[#allocation4 + $0x70] sm:$0xff]
    %v429 = vld [vmem:[#allocation4 + $0x78] sm:$0xff]
    %v430 = vld [vmem:[#allocation4 + $0x80] sm:$0xff]
    %v431 = vld [vmem:[#allocation4 + $0x88] sm:$0xff]
    %v432 = vld [vmem:[#allocation4 + $0x90] sm:$0xff]
    %v433 = vld [vmem:[#allocation4 + $0x98] sm:$0xff]
    %v434 = vld [vmem:[#allocation4 + $0xa0] sm:$0xff]
    %v435 = vld [vmem:[#allocation4 + $0xa8] sm:$0xff]
    %v436 = vld [vmem:[#allocation4 + $0xb0] sm:$0xff]
    %v437 = vld [vmem:[#allocation4 + $0xb8] sm:$0xff]
    %v438 = vld [vmem:[#allocation4 + $0xc0] sm:$0xff]
    %v439 = vld [vmem:[#allocation4 + $0xc8] sm:$0xff]
    %v440 = vld [vmem:[#allocation4 + $0xd0] sm:$0xff]
    %v441 = vld [vmem:[#allocation4 + $0xd8] sm:$0xff]
    %v442 = vld [vmem:[#allocation4 + $0xe0] sm:$0xff]
    %v443 = vld [vmem:[#allocation4 + $0xe8] sm:$0xff]
    %v444 = vld [vmem:[#allocation4 + $0xf0] sm:$0xff]
    %v445 = vld [vmem:[#allocation4 + $0xf8] sm:$0xff]
    %v446 = vld [vmem:[#allocation4 + $0x100] sm:$0xff]
    %v447 = vld [vmem:[#allocation4 + $0x108] sm:$0xff]
    %v448 = vld [vmem:[#allocation4 + $0x110] sm:$0xff]
    %v449 = vld [vmem:[#allocation4 + $0x118] sm:$0xff]
    %v450 = vld [vmem:[#allocation4 + $0x120] sm:$0xff]
    %v451 = vld [vmem:[#allocation4 + $0x128] sm:$0xff]
    %v452 = vld [vmem:[#allocation4 + $0x130] sm:$0xff]
    %v453 = vld [vmem:[#allocation4 + $0x138] sm:$0xff]
    %v454 = vld [vmem:[#allocation4 + $0x140] sm:$0xff]
    %v455 = vld [vmem:[#allocation4 + $0x148] sm:$0xff]
    %v456 = vld [vmem:[#allocation4 + $0x150] sm:$0xff]
    %v457 = vld [vmem:[#allocation4 + $0x158] sm:$0xff]
    %v458 = vld [vmem:[#allocation4 + $0x160] sm:$0xff]
    %v459 = vld [vmem:[#allocation4 + $0x168] sm:$0xff]
    %v460 = vld [vmem:[#allocation4 + $0x170] sm:$0xff]
    %v461 = vld [vmem:[#allocation4 + $0x178] sm:$0xff]
    %v462 = vld [vmem:[#allocation4 + $0x180] sm:$0xff]
    %v463 = vld [vmem:[#allocation4 + $0x188] sm:$0xff]
    %v464 = vld [vmem:[#allocation4 + $0x190] sm:$0xff]
    %v465 = vld [vmem:[#allocation4 + $0x198] sm:$0xff]
    %v466 = vld [vmem:[#allocation4 + $0x1a0] sm:$0xff]
    %v467 = vld [vmem:[#allocation4 + $0x1a8] sm:$0xff]
    %v468 = vld [vmem:[#allocation4 + $0x1b0] sm:$0xff]
    %v469 = vld [vmem:[#allocation4 + $0x1b8] sm:$0xff]
    %v470 = vld [vmem:[#allocation4 + $0x1c0] sm:$0xff]
    %v471 = vld [vmem:[#allocation4 + $0x1c8] sm:$0xff]
    %v472 = vld [vmem:[#allocation4 + $0x1d0] sm:$0xff]
    %v473 = vld [vmem:[#allocation4 + $0x1d8] sm:$0xff]
    %v474 = vld [vmem:[#allocation4 + $0x1e0] sm:$0xff]
    %v475 = vld [vmem:[#allocation4 + $0x1e8] sm:$0xff]
    %v476 = vld [vmem:[#allocation4 + $0x1f0] sm:$0xff]
    %v477 = vld [vmem:[#allocation4 + $0x1f8] sm:$0xff]
    %v478 = vld [vmem:[#allocation4 + $0x200] sm:$0xff]
    %v479 = vld [vmem:[#allocation4 + $0x208] sm:$0xff]
    %v480 = vld [vmem:[#allocation4 + $0x210] sm:$0xff]
    %v481 = vld [vmem:[#allocation4 + $0x218] sm:$0xff]
    %v482 = vld [vmem:[#allocation4 + $0x220] sm:$0xff]
    %v483 = vld [vmem:[#allocation4 + $0x228] sm:$0xff]
    %v484 = vld [vmem:[#allocation4 + $0x230] sm:$0xff]
    %v485 = vld [vmem:[#allocation4 + $0x238] sm:$0xff]
    %v486 = vld [vmem:[#allocation4 + $0x240] sm:$0xff]
    %v487 = vld [vmem:[#allocation4 + $0x248] sm:$0xff]
    %v488 = vld [vmem:[#allocation4 + $0x250] sm:$0xff]
    %v489 = vld [vmem:[#allocation4 + $0x258] sm:$0xff]
    %v490 = vld [vmem:[#allocation4 + $0x260] sm:$0xff]
    %v491 = vld [vmem:[#allocation4 + $0x268] sm:$0xff]
    %v492 = vld [vmem:[#allocation4 + $0x270] sm:$0xff]
    %v493 = vld [vmem:[#allocation4 + $0x278] sm:$0xff]
    %v494 = vld [vmem:[#allocation4 + $0x280] sm:$0xff]
    %v495 = vld [vmem:[#allocation4 + $0x288] sm:$0xff]
    %v496 = vld [vmem:[#allocation4 + $0x290] sm:$0xff]
    %v497 = vld [vmem:[#allocation4 + $0x298] sm:$0xff]
    %v498 = vld [vmem:[#allocation4 + $0x2a0] sm:$0xff]
    %v499 = vld [vmem:[#allocation4 + $0x2a8] sm:$0xff]
    %v500 = vld [vmem:[#allocation4 + $0x2b0] sm:$0xff]
    %v501 = vld [vmem:[#allocation4 + $0x2b8] sm:$0xff]
    %v502 = vld [vmem:[#allocation4 + $0x2c0] sm:$0xff]
    %v503 = vld [vmem:[#allocation4 + $0x2c8] sm:$0xff]
    %v504 = vld [vmem:[#allocation4 + $0x2d0] sm:$0xff]
    %v505 = vld [vmem:[#allocation4 + $0x2d8] sm:$0xff]
    %v506 = vld [vmem:[#allocation4 + $0x2e0] sm:$0xff]
    %v507 = vld [vmem:[#allocation4 + $0x2e8] sm:$0xff]
    %v508 = vld [vmem:[#allocation4 + $0x2f0] sm:$0xff]
    %v509 = vld [vmem:[#allocation4 + $0x2f8] sm:$0xff]
    %v510 = vld [vmem:[#allocation4 + $0x300] sm:$0xff]
    %v511 = vld [vmem:[#allocation4 + $0x308] sm:$0xff]
    %v512 = vld [vmem:[#allocation4 + $0x310] sm:$0xff]
    %v513 = vld [vmem:[#allocation4 + $0x318] sm:$0xff]
    %v514 = vld [vmem:[#allocation4 + $0x320] sm:$0xff]
    %v515 = vld [vmem:[#allocation4 + $0x328] sm:$0xff]
    %v516 = vld [vmem:[#allocation4 + $0x330] sm:$0xff]
    %v517 = vld [vmem:[#allocation4 + $0x338] sm:$0xff]
    %v518 = vld [vmem:[#allocation4 + $0x340] sm:$0xff]
    %v519 = vld [vmem:[#allocation4 + $0x348] sm:$0xff]
    %v520 = vld [vmem:[#allocation4 + $0x350] sm:$0xff]
    %v521 = vld [vmem:[#allocation4 + $0x358] sm:$0xff]
    %v522 = vld [vmem:[#allocation4 + $0x360] sm:$0xff]
    %v523 = vld [vmem:[#allocation4 + $0x368] sm:$0xff]
    %v524 = vld [vmem:[#allocation4 + $0x370] sm:$0xff]
    %v525 = vld [vmem:[#allocation4 + $0x378] sm:$0xff]
    %v526 = vld [vmem:[#allocation4 + $0x380] sm:$0xff]
    %v527 = vld [vmem:[#allocation4 + $0x388] sm:$0xff]
    %v528 = vld [vmem:[#allocation4 + $0x390] sm:$0xff]
    %v529 = vld [vmem:[#allocation4 + $0x398] sm:$0xff]
    %v530 = vld [vmem:[#allocation4 + $0x3a0] sm:$0xff]
    %v531 = vld [vmem:[#allocation4 + $0x3a8] sm:$0xff]
    %v532 = vld [vmem:[#allocation4 + $0x3b0] sm:$0xff]
    %v533 = vld [vmem:[#allocation4 + $0x3b8] sm:$0xff]
    %v534 = vld [vmem:[#allocation4 + $0x3c0] sm:$0xff]
    %v535 = vld [vmem:[#allocation4 + $0x3c8] sm:$0xff]
    %v536 = vld [vmem:[#allocation4 + $0x3d0] sm:$0xff]
    %v537 = vld [vmem:[#allocation4 + $0x3d8] sm:$0xff]
    %v538 = vld [vmem:[#allocation4 + $0x3e0] sm:$0xff]
    %v539 = vld [vmem:[#allocation4 + $0x3e8] sm:$0xff]
    %v540 = vld [vmem:[#allocation4 + $0x3f0] sm:$0xff]
    %v541 = vld [vmem:[#allocation4 + $0x3f8] sm:$0xff]
    %v542 = vld [vmem:[#allocation4 + $0x400] sm:$0xff]
    %v543 = vld [vmem:[#allocation4 + $0x408] sm:$0xff]
    %v544 = vld [vmem:[#allocation4 + $0x410] sm:$0xff]
    %v545 = vld [vmem:[#allocation4 + $0x418] sm:$0xff]
    %v546 = vld [vmem:[#allocation4 + $0x420] sm:$0xff]
    %v547 = vld [vmem:[#allocation4 + $0x428] sm:$0xff]
    %v548 = vld [vmem:[#allocation4 + $0x430] sm:$0xff]
    %v549 = vld [vmem:[#allocation4 + $0x438] sm:$0xff]
    %v550 = vld [vmem:[#allocation4 + $0x440] sm:$0xff]
    %v551 = vld [vmem:[#allocation4 + $0x448] sm:$0xff]
    %v552 = vld [vmem:[#allocation4 + $0x450] sm:$0xff]
    %v553 = vld [vmem:[#allocation4 + $0x458] sm:$0xff]
    %v554 = vld [vmem:[#allocation4 + $0x460] sm:$0xff]
    %v555 = vld [vmem:[#allocation4 + $0x468] sm:$0xff]
    %v556 = vld [vmem:[#allocation4 + $0x470] sm:$0xff]
    %v557 = vld [vmem:[#allocation4 + $0x478] sm:$0xff]
    %v558 = vld [vmem:[#allocation4 + $0x480] sm:$0xff]
    %v559 = vld [vmem:[#allocation4 + $0x488] sm:$0xff]
    %v560 = vld [vmem:[#allocation4 + $0x490] sm:$0xff]
    %v561 = vld [vmem:[#allocation4 + $0x498] sm:$0xff]
    %v562 = vld [vmem:[#allocation4 + $0x4a0] sm:$0xff]
    %v563 = vld [vmem:[#allocation4 + $0x4a8] sm:$0xff]
    %v564 = vld [vmem:[#allocation4 + $0x4b0] sm:$0xff]
    %v565 = vld [vmem:[#allocation4 + $0x4b8] sm:$0xff]
    %v566 = vld [vmem:[#allocation4 + $0x4c0] sm:$0xff]
    %v567 = vld [vmem:[#allocation4 + $0x4c8] sm:$0xff]
    %v568 = vld [vmem:[#allocation4 + $0x4d0] sm:$0xff]
    %v569 = vld [vmem:[#allocation4 + $0x4d8] sm:$0xff]
    %v570 = vld [vmem:[#allocation4 + $0x4e0] sm:$0xff]
    %v571 = vld [vmem:[#allocation4 + $0x4e8] sm:$0xff]
    %v572 = vld [vmem:[#allocation4 + $0x4f0] sm:$0xff]
    %v573 = vld [vmem:[#allocation4 + $0x4f8] sm:$0xff]
    %v574 = vld [vmem:[#allocation4 + $0x500] sm:$0xff]
    %v575 = vld [vmem:[#allocation4 + $0x508] sm:$0xff]
    %v576 = vld [vmem:[#allocation4 + $0x510] sm:$0xff]
    %v577 = vld [vmem:[#allocation4 + $0x518] sm:$0xff]
    %v578 = vld [vmem:[#allocation4 + $0x520] sm:$0xff]
    %v579 = vld [vmem:[#allocation4 + $0x528] sm:$0xff]
    %v580 = vld [vmem:[#allocation4 + $0x530] sm:$0xff]
    %v581 = vld [vmem:[#allocation4 + $0x538] sm:$0xff]
    %v582 = vld [vmem:[#allocation4 + $0x540] sm:$0xff]
    %v583 = vld [vmem:[#allocation4 + $0x548] sm:$0xff]
    %v584 = vld [vmem:[#allocation4 + $0x550] sm:$0xff]
    %v585 = vld [vmem:[#allocation4 + $0x558] sm:$0xff]
    %v586 = vld [vmem:[#allocation4 + $0x560] sm:$0xff]
    %v587 = vld [vmem:[#allocation4 + $0x568] sm:$0xff]
    %v588 = vld [vmem:[#allocation4 + $0x570] sm:$0xff]
    %v589 = vld [vmem:[#allocation4 + $0x578] sm:$0xff]
    %v590 = vld [vmem:[#allocation4 + $0x580] sm:$0xff]
    %v591 = vld [vmem:[#allocation4 + $0x588] sm:$0xff]
    %v592 = vld [vmem:[#allocation4 + $0x590] sm:$0xff]
    %v593 = vld [vmem:[#allocation4 + $0x598] sm:$0xff]
    %v594 = vld [vmem:[#allocation4 + $0x5a0] sm:$0xff]
    %v595 = vld [vmem:[#allocation4 + $0x5a8] sm:$0xff]
    %v596 = vld [vmem:[#allocation4 + $0x5b0] sm:$0xff]
    %v597 = vld [vmem:[#allocation4 + $0x5b8] sm:$0xff]
    %v598 = vld [vmem:[#allocation4 + $0x5c0] sm:$0xff]
    %v599 = vld [vmem:[#allocation4 + $0x5c8] sm:$0xff]
    %v600 = vld [vmem:[#allocation4 + $0x5d0] sm:$0xff]
    %v601 = vld [vmem:[#allocation4 + $0x5d8] sm:$0xff]
    %v602 = vld [vmem:[#allocation4 + $0x5e0] sm:$0xff]
    %v603 = vld [vmem:[#allocation4 + $0x5e8] sm:$0xff]
    %v604 = vld [vmem:[#allocation4 + $0x5f0] sm:$0xff]
    %v605 = vld [vmem:[#allocation4 + $0x5f8] sm:$0xff]
    %v606 = vld [vmem:[%s6] sm:$0x3f]
    %v608 = vlaneseq
    %v609 = vshrl.u32 %v608, 7
    %v610 = vsub.s32 0, %v609
    %v611 = vrot.slane %v606, %v610
    %v612 = vlaneseq
    %v613 = vshrl.u32 %v612, 7
    %v614 = vsub.s32 1, %v613
    %v615 = vrot.slane %v606, %v614
    %v616 = vlaneseq
    %v617 = vshrl.u32 %v616, 7
    %v618 = vsub.s32 2, %v617
    %v619 = vrot.slane %v606, %v618
    %v620 = vlaneseq
    %v621 = vshrl.u32 %v620, 7
    %v622 = vsub.s32 3, %v621
    %v623 = vrot.slane %v606, %v622
    %v624 = vlaneseq
    %v625 = vshrl.u32 %v624, 7
    %v626 = vsub.s32 4, %v625
    %v627 = vrot.slane %v606, %v626
    %v628 = vlaneseq
    %v629 = vshrl.u32 %v628, 7
    %v630 = vsub.s32 5, %v629
    %v631 = vrot.slane %v606, %v630
    %638 = vmatprep.subr.mxu0 %v505
    %639 = vmatpush1.msra.mxu0 %v504
    %640 = vmatprep.subr.mxu0 %v499
    %641 = vmatpush1.msra.mxu0 %v498
    %642 = vmatprep.subr.mxu0 %v493
    %643 = vmatpush1.msra.mxu0 %v492
    %644 = vmatprep.subr.mxu0 %v487
    %645 = vmatpush1.msra.mxu0 %v486
    %646 = vmatprep.subr.mxu0 %v481
    %647 = vmatpush1.msra.mxu0 %v480
    %648 = vmatprep.subr.mxu0 %v475
    %649 = vmatpush1.msra.mxu0 %v474
    %650 = vmatprep.subr.mxu0 %v469
    %651 = vmatpush1.msra.mxu0 %v468
    %652 = vmatprep.subr.mxu0 %v463
    %653 = vmatpush1.msra.mxu0 %v462
    %654 = vmatprep.subr.mxu0 %v457
    %655 = vmatpush1.msra.mxu0 %v456
    %656 = vmatprep.subr.mxu0 %v451
    %657 = vmatpush1.msra.mxu0 %v450
    %658 = vmatprep.subr.mxu0 %v445
    %659 = vmatpush1.msra.mxu0 %v444
    %660 = vmatprep.subr.mxu0 %v439
    %661 = vmatpush1.msra.mxu0 %v438
    %662 = vmatprep.subr.mxu0 %v433
    %663 = vmatpush1.msra.mxu0 %v432
    %664 = vmatprep.subr.mxu0 %v427
    %665 = vmatpush1.msra.mxu0 %v426
    %666 = vmatprep.subr.mxu0 %v421
    %667 = vmatpush1.msra.mxu0 %v420
    %668 = vmatprep.subr.mxu0 %v415
    %669 = vmatpush1.msra.mxu0 %v414
    %670 = vmatprep.subr.mxu0 %v601
    %671 = vmatpush2.msra.mxu0 %v600
    %672 = vmatprep.subr.mxu0 %v595
    %673 = vmatpush2.msra.mxu0 %v594
    %674 = vmatprep.subr.mxu0 %v589
    %675 = vmatpush2.msra.mxu0 %v588
    %676 = vmatprep.subr.mxu0 %v583
    %677 = vmatpush2.msra.mxu0 %v582
    %678 = vmatprep.subr.mxu0 %v577
    %679 = vmatpush2.msra.mxu0 %v576
    %680 = vmatprep.subr.mxu0 %v571
    %681 = vmatpush2.msra.mxu0 %v570
    %682 = vmatprep.subr.mxu0 %v565
    %683 = vmatpush2.msra.mxu0 %v564
    %684 = vmatprep.subr.mxu0 %v559
    %685 = vmatpush2.msra.mxu0 %v558
    %686 = vmatprep.subr.mxu0 %v553
    %687 = vmatpush2.msra.mxu0 %v552
    %688 = vmatprep.subr.mxu0 %v547
    %689 = vmatpush2.msra.mxu0 %v546
    %690 = vmatprep.subr.mxu0 %v541
    %691 = vmatpush2.msra.mxu0 %v540
    %692 = vmatprep.subr.mxu0 %v535
    %693 = vmatpush2.msra.mxu0 %v534
    %694 = vmatprep.subr.mxu0 %v529
    %695 = vmatpush2.msra.mxu0 %v528
    %696 = vmatprep.subr.mxu0 %v523
    %697 = vmatpush2.msra.mxu0 %v522
    %698 = vmatprep.subr.mxu0 %v517
    %699 = vmatpush2.msra.mxu0 %v516
    %700 = vmatprep.subr.mxu0 %v511
    %701 = vmatpush2.msra.mxu0 %v510
    %702 = vmatprep.mubr.f32.mxu0 %v64
    %703 = vmatmul.mubr.f32.gmra.mxu0 %v63
    %v704 = vpop.f32.mrf.mxu0
    %v705 = vadd.f32 %v611, %v704
    %v706 = vpop.f32.mrf.mxu0
    %v707 = vadd.f32 %v615, %v706
    %708 = vdwg.mxu0
    %709 = vmatprep.subr.mxu0 %v507
    %710 = vmatpush1.msra.mxu0 %v506
    %711 = vmatprep.subr.mxu0 %v501
    %712 = vmatpush1.msra.mxu0 %v500
    %713 = vmatprep.subr.mxu0 %v495
    %714 = vmatpush1.msra.mxu0 %v494
    %715 = vmatprep.subr.mxu0 %v489
    %716 = vmatpush1.msra.mxu0 %v488
    %717 = vmatprep.subr.mxu0 %v483
    %718 = vmatpush1.msra.mxu0 %v482
    %719 = vmatprep.subr.mxu0 %v477
    %720 = vmatpush1.msra.mxu0 %v476
    %721 = vmatprep.subr.mxu0 %v471
    %722 = vmatpush1.msra.mxu0 %v470
    %723 = vmatprep.subr.mxu0 %v465
    %724 = vmatpush1.msra.mxu0 %v464
    %725 = vmatprep.subr.mxu0 %v459
    %726 = vmatpush1.msra.mxu0 %v458
    %727 = vmatprep.subr.mxu0 %v453
    %728 = vmatpush1.msra.mxu0 %v452
    %729 = vmatprep.subr.mxu0 %v447
    %730 = vmatpush1.msra.mxu0 %v446
    %731 = vmatprep.subr.mxu0 %v441
    %732 = vmatpush1.msra.mxu0 %v440
    %733 = vmatprep.subr.mxu0 %v435
    %734 = vmatpush1.msra.mxu0 %v434
    %735 = vmatprep.subr.mxu0 %v429
    %736 = vmatpush1.msra.mxu0 %v428
    %737 = vmatprep.subr.mxu0 %v423
    %738 = vmatpush1.msra.mxu0 %v422
    %739 = vmatprep.subr.mxu0 %v417
    %740 = vmatpush1.msra.mxu0 %v416
    %741 = vmatprep.subr.mxu0 %v603
    %742 = vmatpush2.msra.mxu0 %v602
    %743 = vmatprep.subr.mxu0 %v597
    %744 = vmatpush2.msra.mxu0 %v596
    %745 = vmatprep.subr.mxu0 %v591
    %746 = vmatpush2.msra.mxu0 %v590
    %747 = vmatprep.subr.mxu0 %v585
    %748 = vmatpush2.msra.mxu0 %v584
    %749 = vmatprep.subr.mxu0 %v579
    %750 = vmatpush2.msra.mxu0 %v578
    %751 = vmatprep.subr.mxu0 %v573
    %752 = vmatpush2.msra.mxu0 %v572
    %753 = vmatprep.subr.mxu0 %v567
    %754 = vmatpush2.msra.mxu0 %v566
    %755 = vmatprep.subr.mxu0 %v561
    %756 = vmatpush2.msra.mxu0 %v560
    %757 = vmatprep.subr.mxu0 %v555
    %758 = vmatpush2.msra.mxu0 %v554
    %759 = vmatprep.subr.mxu0 %v549
    %760 = vmatpush2.msra.mxu0 %v548
    %761 = vmatprep.subr.mxu0 %v543
    %762 = vmatpush2.msra.mxu0 %v542
    %763 = vmatprep.subr.mxu0 %v537
    %764 = vmatpush2.msra.mxu0 %v536
    %765 = vmatprep.subr.mxu0 %v531
    %766 = vmatpush2.msra.mxu0 %v530
    %767 = vmatprep.subr.mxu0 %v525
    %768 = vmatpush2.msra.mxu0 %v524
    %769 = vmatprep.subr.mxu0 %v519
    %770 = vmatpush2.msra.mxu0 %v518
    %771 = vmatprep.subr.mxu0 %v513
    %772 = vmatpush2.msra.mxu0 %v512
    %773 = vmatprep.mubr.f32.mxu0 %v64
    %774 = vmatmul.mubr.f32.gmra.mxu0 %v63
    %v775 = vpop.f32.mrf.mxu0
    %v776 = vadd.f32 %v619, %v775
    %v777 = vpop.f32.mrf.mxu0
    %v778 = vadd.f32 %v623, %v777
    %779 = vdwg.mxu0
    %780 = vmatprep.subr.mxu0 %v509
    %781 = vmatpush1.msra.mxu0 %v508
    %782 = vmatprep.subr.mxu0 %v503
    %783 = vmatpush1.msra.mxu0 %v502
    %784 = vmatprep.subr.mxu0 %v497
    %785 = vmatpush1.msra.mxu0 %v496
    %786 = vmatprep.subr.mxu0 %v491
    %787 = vmatpush1.msra.mxu0 %v490
    %788 = vmatprep.subr.mxu0 %v485
    %789 = vmatpush1.msra.mxu0 %v484
    %790 = vmatprep.subr.mxu0 %v479
    %791 = vmatpush1.msra.mxu0 %v478
    %792 = vmatprep.subr.mxu0 %v473
    %793 = vmatpush1.msra.mxu0 %v472
    %794 = vmatprep.subr.mxu0 %v467
    %795 = vmatpush1.msra.mxu0 %v466
    %796 = vmatprep.subr.mxu0 %v461
    %797 = vmatpush1.msra.mxu0 %v460
    %798 = vmatprep.subr.mxu0 %v455
    %799 = vmatpush1.msra.mxu0 %v454
    %800 = vmatprep.subr.mxu0 %v449
    %801 = vmatpush1.msra.mxu0 %v448
    %802 = vmatprep.subr.mxu0 %v443
    %803 = vmatpush1.msra.mxu0 %v442
    %804 = vmatprep.subr.mxu0 %v437
    %805 = vmatpush1.msra.mxu0 %v436
    %806 = vmatprep.subr.mxu0 %v431
    %807 = vmatpush1.msra.mxu0 %v430
    %808 = vmatprep.subr.mxu0 %v425
    %809 = vmatpush1.msra.mxu0 %v424
    %810 = vmatprep.subr.mxu0 %v419
    %811 = vmatpush1.msra.mxu0 %v418
    %812 = vmatprep.subr.mxu0 %v605
    %813 = vmatpush2.msra.mxu0 %v604
    %814 = vmatprep.subr.mxu0 %v599
    %815 = vmatpush2.msra.mxu0 %v598
    %816 = vmatprep.subr.mxu0 %v593
    %817 = vmatpush2.msra.mxu0 %v592
    %818 = vmatprep.subr.mxu0 %v587
    %819 = vmatpush2.msra.mxu0 %v586
    %820 = vmatprep.subr.mxu0 %v581
    %821 = vmatpush2.msra.mxu0 %v580
    %822 = vmatprep.subr.mxu0 %v575
    %823 = vmatpush2.msra.mxu0 %v574
    %824 = vmatprep.subr.mxu0 %v569
    %825 = vmatpush2.msra.mxu0 %v568
    %826 = vmatprep.subr.mxu0 %v563
    %827 = vmatpush2.msra.mxu0 %v562
    %828 = vmatprep.subr.mxu0 %v557
    %829 = vmatpush2.msra.mxu0 %v556
    %830 = vmatprep.subr.mxu0 %v551
    %831 = vmatpush2.msra.mxu0 %v550
    %832 = vmatprep.subr.mxu0 %v545
    %833 = vmatpush2.msra.mxu0 %v544
    %834 = vmatprep.subr.mxu0 %v539
    %835 = vmatpush2.msra.mxu0 %v538
    %836 = vmatprep.subr.mxu0 %v533
    %837 = vmatpush2.msra.mxu0 %v532
    %838 = vmatprep.subr.mxu0 %v527
    %839 = vmatpush2.msra.mxu0 %v526
    %840 = vmatprep.subr.mxu0 %v521
    %841 = vmatpush2.msra.mxu0 %v520
    %842 = vmatprep.subr.mxu0 %v515
    %843 = vmatpush2.msra.mxu0 %v514
    %844 = vmatprep.mubr.f32.mxu0 %v64
    %845 = vmatmul.mubr.f32.gmra.mxu0 %v63
    %v846 = vpop.f32.mrf.mxu0
    %v847 = vadd.f32 %v627, %v846
    %v848 = vpop.f32.mrf.mxu0
    %v849 = vadd.f32 %v631, %v848
    %850 = vdwg.mxu0
    %v851 = vadd.f32 %v268, %v705
    %v852 = vxor.u32 %v851, 2147483648
    %v853 = vmul.f32 %v852, 1.442695
    %v854 = vpow.pop %v853
    %v855 = vadd.f32 %v854, 1.0
    %v856 = vrcp.pop %v855
    %v857 = vmul.f32 1.0, %v856
    %v858 = vadd.f32 %v270, %v707
    %v859 = vxor.u32 %v858, 2147483648
    %v860 = vmul.f32 %v859, 1.442695
    %v861 = vpow.pop %v860
    %v862 = vadd.f32 %v861, 1.0
    %v863 = vrcp.pop %v862
    %v864 = vmul.f32 1.0, %v863
    %v865 = vmul.f32 %v857, %v776
    %v866 = vadd.f32 %v339, %v865
    %v867 = vtanh.pop %v866
    %v868 = vsub.f32 1.0, %v864
    %v869 = vmul.f32 %v868, %v867
    %v870 = vmul.f32 %v864, %v63
    %v871 = vadd.f32 %v869, %v870
    %v872 = vadd.f32 %v341, %v778
    %v873 = vxor.u32 %v872, 2147483648
    %v874 = vmul.f32 %v873, 1.442695
    %v875 = vpow.pop %v874
    %v876 = vadd.f32 %v875, 1.0
    %v877 = vrcp.pop %v876
    %v878 = vmul.f32 1.0, %v877
    %v879 = vadd.f32 %v410, %v847
    %v880 = vxor.u32 %v879, 2147483648
    %v881 = vmul.f32 %v880, 1.442695
    %v882 = vpow.pop %v881
    %v883 = vadd.f32 %v882, 1.0
    %v884 = vrcp.pop %v883
    %v885 = vmul.f32 1.0, %v884
    %v886 = vmul.f32 %v878, %v849
    %v887 = vadd.f32 %v412, %v886
    %v888 = vtanh.pop %v887
    %v889 = vsub.f32 1.0, %v885
    %v890 = vmul.f32 %v889, %v888
    %v891 = vmul.f32 %v885, %v64
    %v892 = vadd.f32 %v890, %v891
    %893 = vst [vmem:[%s10] sm:$0xff] %v871
    %894 = vst [vmem:[%s10 + $0x8] sm:$0xff] %v892
    %v895 = vadd.f32 %v871, %v892
    %v897 = vcombine.high %v895, %v895
    %v899 = vunpack.c.l.s4 1966171168
    %v900 = vunpack.c.0.s8 %v899
    %v901 = vlaneseq
    %v902 = vshrl.u32 %v901, 7
    %v903 = vsub.s32 %v900, %v902
    %v904 = vrot.slane %v895, %v903
    %v906 = vunpack.c.l.s4 1966171168
    %v907 = vunpack.c.0.s8 %v906
    %v908 = vlaneseq
    %v909 = vshrl.u32 %v908, 7
    %v910 = vsub.s32 %v907, %v909
    %v911 = vrot.slane %v897, %v910
    %v912 = vcombine.high %v904, %v904
    %v913 = vcombine.high %v911, %v911
    %v915 = vunpack.c.l.s4 1966171168
    %v916 = vunpack.c.0.s8 %v915
    %v917 = vlaneseq
    %v918 = vshrl.u32 %v917, 7
    %v919 = vsub.s32 %v916, %v918
    %v920 = vrot.slane %v904, %v919
    %v922 = vunpack.c.l.s4 1966171168
    %v923 = vunpack.c.0.s8 %v922
    %v924 = vlaneseq
    %v925 = vshrl.u32 %v924, 7
    %v926 = vsub.s32 %v923, %v925
    %v927 = vrot.slane %v911, %v926
    %v929 = vunpack.c.l.s4 1966171168
    %v930 = vunpack.c.0.s8 %v929
    %v931 = vlaneseq
    %v932 = vshrl.u32 %v931, 7
    %v933 = vsub.s32 %v930, %v932
    %v934 = vrot.slane %v912, %v933
    %v936 = vunpack.c.l.s4 1966171168
    %v937 = vunpack.c.0.s8 %v936
    %v938 = vlaneseq
    %v939 = vshrl.u32 %v938, 7
    %v940 = vsub.s32 %v937, %v939
    %v941 = vrot.slane %v913, %v940
    %v942 = vcombine.high %v920, %v920
    %v943 = vcombine.high %v927, %v927
    %v944 = vcombine.high %v934, %v934
    %v945 = vcombine.high %v941, %v941
    %v946 = vlaneseq
    %v947 = vshrl.u32 %v946, 7
    %v948 = vsub.s32 0, %v947
    %v949 = vrot.slane %v920, %v948
    %v950 = vlaneseq
    %v951 = vshrl.u32 %v950, 7
    %v952 = vsub.s32 0, %v951
    %v953 = vrot.slane %v934, %v952
    %v954 = vlaneseq
    %v955 = vshrl.u32 %v954, 7
    %v956 = vsub.s32 0, %v955
    %v957 = vrot.slane %v942, %v956
    %v958 = vlaneseq
    %v959 = vshrl.u32 %v958, 7
    %v960 = vsub.s32 0, %v959
    %v961 = vrot.slane %v944, %v960
    %v962 = vlaneseq
    %v963 = vshrl.u32 %v962, 7
    %v964 = vsub.s32 0, %v963
    %v965 = vrot.slane %v927, %v964
    %v966 = vlaneseq
    %v967 = vshrl.u32 %v966, 7
    %v968 = vsub.s32 0, %v967
    %v969 = vrot.slane %v941, %v968
    %v970 = vlaneseq
    %v971 = vshrl.u32 %v970, 7
    %v972 = vsub.s32 0, %v971
    %v973 = vrot.slane %v943, %v972
    %v974 = vlaneseq
    %v975 = vshrl.u32 %v974, 7
    %v976 = vsub.s32 0, %v975
    %v977 = vrot.slane %v945, %v976
    %v986 = vmul.f32 %v949, %v65
    %v987 = vmul.f32 %v953, %v66
    %v988 = vmul.f32 %v957, %v67
    %v989 = vmul.f32 %v961, %v68
    %v990 = vmul.f32 %v965, %v69
    %v991 = vmul.f32 %v969, %v70
    %v992 = vmul.f32 %v973, %v71
    %v993 = vmul.f32 %v977, %v72
    %994 = vadd.xlane.f32.xlu0 %v986
    %v995 = vpop.xlane.xlu0 %994
    %996 = vadd.xlane.f32.xlu0 %v987
    %v997 = vpop.xlane.xlu0 %996
    %998 = vadd.xlane.f32.xlu0 %v988
    %v999 = vpop.xlane.xlu0 %998
    %1000 = vadd.xlane.f32.xlu0 %v989
    %v1001 = vpop.xlane.xlu0 %1000
    %1002 = vadd.xlane.f32.xlu0 %v990
    %v1003 = vpop.xlane.xlu0 %1002
    %1004 = vadd.xlane.f32.xlu0 %v991
    %v1005 = vpop.xlane.xlu0 %1004
    %1006 = vadd.xlane.f32.xlu0 %v992
    %v1007 = vpop.xlane.xlu0 %1006
    %1008 = vadd.xlane.f32.xlu0 %v993
    %v1009 = vpop.xlane.xlu0 %1008
    %v1018 = vlaneseq
    %v1019 = vand.u32 %v1018, 127
    %v1020 = vlaneseq
    %v1021 = vshrl.u32 %v1020, 7
    %v1022 = vsub.s32 %v1019, %v1021
    %v1023 = vrot.slane %v995, %v1022
    %v1024 = vlaneseq
    %v1025 = vshrl.u32 %v1024, 7
    %v1026 = vsub.s32 %v1019, %v1025
    %v1027 = vrot.slane %v997, %v1026
    %v1028 = vlaneseq
    %v1029 = vshrl.u32 %v1028, 7
    %v1030 = vsub.s32 %v1019, %v1029
    %v1031 = vrot.slane %v999, %v1030
    %v1032 = vlaneseq
    %v1033 = vshrl.u32 %v1032, 7
    %v1034 = vsub.s32 %v1019, %v1033
    %v1035 = vrot.slane %v1001, %v1034
    %v1036 = vlaneseq
    %v1037 = vshrl.u32 %v1036, 7
    %v1038 = vsub.s32 %v1019, %v1037
    %v1039 = vrot.slane %v1003, %v1038
    %v1040 = vlaneseq
    %v1041 = vshrl.u32 %v1040, 7
    %v1042 = vsub.s32 %v1019, %v1041
    %v1043 = vrot.slane %v1005, %v1042
    %v1044 = vlaneseq
    %v1045 = vshrl.u32 %v1044, 7
    %v1046 = vsub.s32 %v1019, %v1045
    %v1047 = vrot.slane %v1007, %v1046
    %v1048 = vlaneseq
    %v1049 = vshrl.u32 %v1048, 7
    %v1050 = vsub.s32 %v1019, %v1049
    %v1051 = vrot.slane %v1009, %v1050
    %vm1052 = vcmask 1041409
    %v1053 = vsel %vm1052, %v1027, %v1023
    %vm1054 = vcmask 1042434
    %v1055 = vsel %vm1054, %v1031, %v1053
    %vm1056 = vcmask 1043459
    %v1057 = vsel %vm1056, %v1035, %v1055
    %vm1058 = vcmask 1044484
    %v1059 = vsel %vm1058, %v1039, %v1057
    %vm1060 = vcmask 1045509
    %v1061 = vsel %vm1060, %v1043, %v1059
    %vm1062 = vcmask 1046534
    %v1063 = vsel %vm1062, %v1047, %v1061
    %vm1064 = vcmask 1047559
    %v1065 = vsel %vm1064, %v1051, %v1063
    %vm1067 = vcmask 64512
    %v1068 = vsel %vm1067, %v1065, -inf
    %1069 = vmax.xlane.f32.xlu0 %v1068
    %v1070 = vpop.xlane.xlu0 %1069
    %v1072 = vlaneseq
    %v1073 = vshrl.u32 %v1072, 7
    %v1074 = vsub.s32 0, %v1073
    %v1075 = vrot.slane %v1070, %v1074
    %v1076 = vlaneseq
    %v1077 = vshrl.u32 %v1076, 7
    %v1078 = vsub.s32 1, %v1077
    %v1079 = vrot.slane %v1070, %v1078
    %v1080 = vlaneseq
    %v1081 = vshrl.u32 %v1080, 7
    %v1082 = vsub.s32 2, %v1081
    %v1083 = vrot.slane %v1070, %v1082
    %v1084 = vlaneseq
    %v1085 = vshrl.u32 %v1084, 7
    %v1086 = vsub.s32 3, %v1085
    %v1087 = vrot.slane %v1070, %v1086
    %v1088 = vlaneseq
    %v1089 = vshrl.u32 %v1088, 7
    %v1090 = vsub.s32 4, %v1089
    %v1091 = vrot.slane %v1070, %v1090
    %v1092 = vlaneseq
    %v1093 = vshrl.u32 %v1092, 7
    %v1094 = vsub.s32 5, %v1093
    %v1095 = vrot.slane %v1070, %v1094
    %v1096 = vlaneseq
    %v1097 = vshrl.u32 %v1096, 7
    %v1098 = vsub.s32 6, %v1097
    %v1099 = vrot.slane %v1070, %v1098
    %v1100 = vlaneseq
    %v1101 = vshrl.u32 %v1100, 7
    %v1102 = vsub.s32 7, %v1101
    %v1103 = vrot.slane %v1070, %v1102
    %v1112 = vsub.f32 %v995, %v1075
    %v1113 = vsub.f32 %v997, %v1079
    %v1114 = vsub.f32 %v999, %v1083
    %v1115 = vsub.f32 %v1001, %v1087
    %v1116 = vsub.f32 %v1003, %v1091
    %v1117 = vsub.f32 %v1005, %v1095
    %v1118 = vsub.f32 %v1007, %v1099
    %v1119 = vsub.f32 %v1009, %v1103
    %v1120 = vmul.f32 %v1112, 1.442695
    %v1121 = vpow.pop %v1120
    %v1122 = vmul.f32 %v1113, 1.442695
    %v1123 = vpow.pop %v1122
    %v1124 = vmul.f32 %v1114, 1.442695
    %v1125 = vpow.pop %v1124
    %v1126 = vmul.f32 %v1115, 1.442695
    %v1127 = vpow.pop %v1126
    %v1128 = vmul.f32 %v1116, 1.442695
    %v1129 = vpow.pop %v1128
    %v1130 = vmul.f32 %v1117, 1.442695
    %v1131 = vpow.pop %v1130
    %v1132 = vmul.f32 %v1118, 1.442695
    %v1133 = vpow.pop %v1132
    %v1134 = vmul.f32 %v1119, 1.442695
    %v1135 = vpow.pop %v1134
    %1144 = vset.pattern.permute.xlu0 0
    %1145 = vperm.xlu0 %1144, %v1121
    %v1146 = vpop.permute.xlu0 %1145
    %1147 = vset.pattern.permute.xlu0 0
    %1148 = vperm.xlu0 %1147, %v1123
    %v1149 = vpop.permute.xlu0 %1148
    %1150 = vset.pattern.permute.xlu0 0
    %1151 = vperm.xlu0 %1150, %v1125
    %v1152 = vpop.permute.xlu0 %1151
    %1153 = vset.pattern.permute.xlu0 0
    %1154 = vperm.xlu0 %1153, %v1127
    %v1155 = vpop.permute.xlu0 %1154
    %1156 = vset.pattern.permute.xlu0 0
    %1157 = vperm.xlu0 %1156, %v1129
    %v1158 = vpop.permute.xlu0 %1157
    %1159 = vset.pattern.permute.xlu0 0
    %1160 = vperm.xlu0 %1159, %v1131
    %v1161 = vpop.permute.xlu0 %1160
    %1162 = vset.pattern.permute.xlu0 0
    %1163 = vperm.xlu0 %1162, %v1133
    %v1164 = vpop.permute.xlu0 %1163
    %1165 = vset.pattern.permute.xlu0 0
    %1166 = vperm.xlu0 %1165, %v1135
    %v1167 = vpop.permute.xlu0 %1166
    %v1168 = vlaneseq
    %v1169 = vshrl.u32 %v1168, 7
    %v1170 = vsub.s32 %v1019, %v1169
    %v1171 = vrot.slane %v1146, %v1170
    %v1172 = vlaneseq
    %v1173 = vshrl.u32 %v1172, 7
    %v1174 = vsub.s32 %v1019, %v1173
    %v1175 = vrot.slane %v1149, %v1174
    %v1176 = vlaneseq
    %v1177 = vshrl.u32 %v1176, 7
    %v1178 = vsub.s32 %v1019, %v1177
    %v1179 = vrot.slane %v1152, %v1178
    %v1180 = vlaneseq
    %v1181 = vshrl.u32 %v1180, 7
    %v1182 = vsub.s32 %v1019, %v1181
    %v1183 = vrot.slane %v1155, %v1182
    %v1184 = vlaneseq
    %v1185 = vshrl.u32 %v1184, 7
    %v1186 = vsub.s32 %v1019, %v1185
    %v1187 = vrot.slane %v1158, %v1186
    %v1188 = vlaneseq
    %v1189 = vshrl.u32 %v1188, 7
    %v1190 = vsub.s32 %v1019, %v1189
    %v1191 = vrot.slane %v1161, %v1190
    %v1192 = vlaneseq
    %v1193 = vshrl.u32 %v1192, 7
    %v1194 = vsub.s32 %v1019, %v1193
    %v1195 = vrot.slane %v1164, %v1194
    %v1196 = vlaneseq
    %v1197 = vshrl.u32 %v1196, 7
    %v1198 = vsub.s32 %v1019, %v1197
    %v1199 = vrot.slane %v1167, %v1198
    %v1200 = vsel %vm1052, %v1175, %v1171
    %v1201 = vsel %vm1054, %v1179, %v1200
    %v1202 = vsel %vm1056, %v1183, %v1201
    %v1203 = vsel %vm1058, %v1187, %v1202
    %v1204 = vsel %vm1060, %v1191, %v1203
    %v1205 = vsel %vm1062, %v1195, %v1204
    %v1206 = vsel %vm1064, %v1199, %v1205
    %v1208 = vsel %vm1067, %v1206, 0.0
    %1209 = vadd.xlane.f32.xlu0 %v1208
    %v1210 = vpop.xlane.xlu0 %1209
    %v1211 = vrcp.pop %v1210
    %v1213 = vlaneseq
    %v1214 = vshrl.u32 %v1213, 7
    %v1215 = vsub.s32 0, %v1214
    %v1216 = vrot.slane %v1211, %v1215
    %v1217 = vlaneseq
    %v1218 = vshrl.u32 %v1217, 7
    %v1219 = vsub.s32 1, %v1218
    %v1220 = vrot.slane %v1211, %v1219
    %v1221 = vlaneseq
    %v1222 = vshrl.u32 %v1221, 7
    %v1223 = vsub.s32 2, %v1222
    %v1224 = vrot.slane %v1211, %v1223
    %v1225 = vlaneseq
    %v1226 = vshrl.u32 %v1225, 7
    %v1227 = vsub.s32 3, %v1226
    %v1228 = vrot.slane %v1211, %v1227
    %v1229 = vlaneseq
    %v1230 = vshrl.u32 %v1229, 7
    %v1231 = vsub.s32 4, %v1230
    %v1232 = vrot.slane %v1211, %v1231
    %v1233 = vlaneseq
    %v1234 = vshrl.u32 %v1233, 7
    %v1235 = vsub.s32 5, %v1234
    %v1236 = vrot.slane %v1211, %v1235
    %v1237 = vlaneseq
    %v1238 = vshrl.u32 %v1237, 7
    %v1239 = vsub.s32 6, %v1238
    %v1240 = vrot.slane %v1211, %v1239
    %v1241 = vlaneseq
    %v1242 = vshrl.u32 %v1241, 7
    %v1243 = vsub.s32 7, %v1242
    %v1244 = vrot.slane %v1211, %v1243
    %v1253 = vmul.f32 %v1121, %v1216
    %v1254 = vmul.f32 %v1123, %v1220
    %v1255 = vmul.f32 %v1125, %v1224
    %v1256 = vmul.f32 %v1127, %v1228
    %v1257 = vmul.f32 %v1129, %v1232
    %v1258 = vmul.f32 %v1131, %v1236
    %v1259 = vmul.f32 %v1133, %v1240
    %v1260 = vmul.f32 %v1135, %v1244
    %1262 = vset.pattern.permute.xlu0 0
    %1263 = vperm.xlu0 %1262, %v1253
    %v1264 = vpop.permute.xlu0 %1263
    %1267 = vset.pattern.permute.xlu0 0
    %1268 = vperm.xlu0 %1267, %v1254
    %v1269 = vpop.permute.xlu0 %1268
    %1272 = vset.pattern.permute.xlu0 0
    %1273 = vperm.xlu0 %1272, %v1255
    %v1274 = vpop.permute.xlu0 %1273
    %1277 = vset.pattern.permute.xlu0 0
    %1278 = vperm.xlu0 %1277, %v1256
    %v1279 = vpop.permute.xlu0 %1278
    %1282 = vset.pattern.permute.xlu0 0
    %1283 = vperm.xlu0 %1282, %v1257
    %v1284 = vpop.permute.xlu0 %1283
    %1287 = vset.pattern.permute.xlu0 0
    %1288 = vperm.xlu0 %1287, %v1258
    %v1289 = vpop.permute.xlu0 %1288
    %1292 = vset.pattern.permute.xlu0 0
    %1293 = vperm.xlu0 %1292, %v1259
    %v1294 = vpop.permute.xlu0 %1293
    %1297 = vset.pattern.permute.xlu0 0
    %1298 = vperm.xlu0 %1297, %v1260
    %v1299 = vpop.permute.xlu0 %1298
    %v1301 = vmul.f32 %v1264, %v65
    %v1302 = vmul.f32 %v1269, %v66
    %v1303 = vmul.f32 %v1274, %v67
    %v1304 = vmul.f32 %v1279, %v68
    %v1305 = vmul.f32 %v1284, %v69
    %v1306 = vmul.f32 %v1289, %v70
    %v1307 = vmul.f32 %v1294, %v71
    %v1308 = vmul.f32 %v1299, %v72
    %v1309 = vrot.slane %v1301, 4
    %v1310 = vadd.f32 %v1301, %v1309
    %v1311 = vrot.slane %v1310, 2
    %v1312 = vadd.f32 %v1310, %v1311
    %v1313 = vrot.slane %v1312, 1
    %v1314 = vadd.f32 %v1312, %v1313
    %v1315 = vrot.slane %v1302, 4
    %v1316 = vadd.f32 %v1302, %v1315
    %v1317 = vrot.slane %v1316, 2
    %v1318 = vadd.f32 %v1316, %v1317
    %v1319 = vrot.slane %v1318, 1
    %v1320 = vadd.f32 %v1318, %v1319
    %v1321 = vrot.slane %v1303, 4
    %v1322 = vadd.f32 %v1303, %v1321
    %v1323 = vrot.slane %v1322, 2
    %v1324 = vadd.f32 %v1322, %v1323
    %v1325 = vrot.slane %v1324, 1
    %v1326 = vadd.f32 %v1324, %v1325
    %v1327 = vrot.slane %v1304, 4
    %v1328 = vadd.f32 %v1304, %v1327
    %v1329 = vrot.slane %v1328, 2
    %v1330 = vadd.f32 %v1328, %v1329
    %v1331 = vrot.slane %v1330, 1
    %v1332 = vadd.f32 %v1330, %v1331
    %v1333 = vrot.slane %v1305, 4
    %v1334 = vadd.f32 %v1305, %v1333
    %v1335 = vrot.slane %v1334, 2
    %v1336 = vadd.f32 %v1334, %v1335
    %v1337 = vrot.slane %v1336, 1
    %v1338 = vadd.f32 %v1336, %v1337
    %v1339 = vrot.slane %v1306, 4
    %v1340 = vadd.f32 %v1306, %v1339
    %v1341 = vrot.slane %v1340, 2
    %v1342 = vadd.f32 %v1340, %v1341
    %v1343 = vrot.slane %v1342, 1
    %v1344 = vadd.f32 %v1342, %v1343
    %v1345 = vrot.slane %v1307, 4
    %v1346 = vadd.f32 %v1307, %v1345
    %v1347 = vrot.slane %v1346, 2
    %v1348 = vadd.f32 %v1346, %v1347
    %v1349 = vrot.slane %v1348, 1
    %v1350 = vadd.f32 %v1348, %v1349
    %v1351 = vrot.slane %v1308, 4
    %v1352 = vadd.f32 %v1308, %v1351
    %v1353 = vrot.slane %v1352, 2
    %v1354 = vadd.f32 %v1352, %v1353
    %v1355 = vrot.slane %v1354, 1
    %v1356 = vadd.f32 %v1354, %v1355
    %v1357 = vld [vmem:[%s7] sm:$0xff]
    %v1358 = vld [vmem:[%s7 + $0x8] sm:$0xff]
    %v1359 = vld [vmem:[%s7 + $0x10] sm:$0xff]
    %v1360 = vld [vmem:[%s7 + $0x18] sm:$0xff]
    %v1361 = vld [vmem:[%s7 + $0x20] sm:$0xff]
    %v1362 = vld [vmem:[%s7 + $0x28] sm:$0xff]
    %v1363 = vld [vmem:[%s7 + $0x30] sm:$0xff]
    %v1364 = vld [vmem:[%s7 + $0x38] sm:$0xff]
    %v1365 = vld [vmem:[%s7 + $0x40] sm:$0xff]
    %v1366 = vld [vmem:[%s7 + $0x48] sm:$0xff]
    %v1367 = vld [vmem:[%s7 + $0x50] sm:$0xff]
    %v1368 = vld [vmem:[%s7 + $0x58] sm:$0xff]
    %v1369 = vld [vmem:[%s7 + $0x60] sm:$0xff]
    %v1370 = vld [vmem:[%s7 + $0x68] sm:$0xff]
    %v1371 = vld [vmem:[%s7 + $0x70] sm:$0xff]
    %v1372 = vld [vmem:[%s7 + $0x78] sm:$0xff]
    %v1373 = vld [vmem:[%s8] sm:$0x1]
    %v1375 = vlaneseq
    %v1376 = vshrl.u32 %v1375, 7
    %v1377 = vsub.s32 0, %v1376
    %v1378 = vrot.slane %v1373, %v1377
    %v1388 = vsel %vm1052, %v1320, %v1314
    %v1389 = vsel %vm1054, %v1326, %v1388
    %v1390 = vsel %vm1056, %v1332, %v1389
    %v1391 = vsel %vm1058, %v1338, %v1390
    %v1392 = vsel %vm1060, %v1344, %v1391
    %v1393 = vsel %vm1062, %v1350, %v1392
    %v1394 = vsel %vm1064, %v1356, %v1393
    %1396 = vmatprep.subr.mxu0 0.0
    %1397 = vmatpush1.msra.mxu0 %v1372
    %1398 = vmatprep.subr.mxu0 0.0
    %1399 = vmatpush1.msra.mxu0 %v1371
    %1400 = vmatprep.subr.mxu0 0.0
    %1401 = vmatpush1.msra.mxu0 %v1370
    %1402 = vmatprep.subr.mxu0 0.0
    %1403 = vmatpush1.msra.mxu0 %v1369
    %1404 = vmatprep.subr.mxu0 0.0
    %1405 = vmatpush1.msra.mxu0 %v1368
    %1406 = vmatprep.subr.mxu0 0.0
    %1407 = vmatpush1.msra.mxu0 %v1367
    %1408 = vmatprep.subr.mxu0 0.0
    %1409 = vmatpush1.msra.mxu0 %v1366
    %1410 = vmatprep.subr.mxu0 0.0
    %1411 = vmatpush1.msra.mxu0 %v1365
    %1412 = vmatprep.subr.mxu0 0.0
    %1413 = vmatpush1.msra.mxu0 %v1364
    %1414 = vmatprep.subr.mxu0 0.0
    %1415 = vmatpush1.msra.mxu0 %v1363
    %1416 = vmatprep.subr.mxu0 0.0
    %1417 = vmatpush1.msra.mxu0 %v1362
    %1418 = vmatprep.subr.mxu0 0.0
    %1419 = vmatpush1.msra.mxu0 %v1361
    %1420 = vmatprep.subr.mxu0 0.0
    %1421 = vmatpush1.msra.mxu0 %v1360
    %1422 = vmatprep.subr.mxu0 0.0
    %1423 = vmatpush1.msra.mxu0 %v1359
    %1424 = vmatprep.subr.mxu0 0.0
    %1425 = vmatpush1.msra.mxu0 %v1358
    %1426 = vmatprep.subr.mxu0 0.0
    %1427 = vmatpush1.msra.mxu0 %v1357
    %1428 = vmatprep.subr.mxu0 0.0
    %1429 = vmatpush2.msra.mxu0 0.0
    %1430 = vmatprep.subr.mxu0 0.0
    %1431 = vmatpush2.msra.mxu0 0.0
    %1432 = vmatprep.subr.mxu0 0.0
    %1433 = vmatpush2.msra.mxu0 0.0
    %1434 = vmatprep.subr.mxu0 0.0
    %1435 = vmatpush2.msra.mxu0 0.0
    %1436 = vmatprep.subr.mxu0 0.0
    %1437 = vmatpush2.msra.mxu0 0.0
    %1438 = vmatprep.subr.mxu0 0.0
    %1439 = vmatpush2.msra.mxu0 0.0
    %1440 = vmatprep.subr.mxu0 0.0
    %1441 = vmatpush2.msra.mxu0 0.0
    %1442 = vmatprep.subr.mxu0 0.0
    %1443 = vmatpush2.msra.mxu0 0.0
    %1444 = vmatprep.subr.mxu0 0.0
    %1445 = vmatpush2.msra.mxu0 0.0
    %1446 = vmatprep.subr.mxu0 0.0
    %1447 = vmatpush2.msra.mxu0 0.0
    %1448 = vmatprep.subr.mxu0 0.0
    %1449 = vmatpush2.msra.mxu0 0.0
    %1450 = vmatprep.subr.mxu0 0.0
    %1451 = vmatpush2.msra.mxu0 0.0
    %1452 = vmatprep.subr.mxu0 0.0
    %1453 = vmatpush2.msra.mxu0 0.0
    %1454 = vmatprep.subr.mxu0 0.0
    %1455 = vmatpush2.msra.mxu0 0.0
    %1456 = vmatprep.subr.mxu0 0.0
    %1457 = vmatpush2.msra.mxu0 0.0
    %1458 = vmatprep.subr.mxu0 0.0
    %1459 = vmatpush2.msra.mxu0 0.0
    %1460 = vmatprep.mubr.f32.mxu0 0.0
    %1461 = vmatmul.mubr.f32.gmra.mxu0 %v1394
    %v1462 = vpop.f32.mrf.mxu0
    %v1463 = vadd.f32 %v1378, %v1462
    %v1464 = vpop.f32.mrf.mxu0
    %1465 = vdwg.mxu0
    %vm1466 = vcmp.lt.s32.totalorder %v1019, 40
    %v1467 = vsel %vm1466, %v1463, -1e+30
    %1468 = vmax.xlane.f32.xlu0 %v1467
    %v1469 = vpop.xlane.xlu0 %1468
    %v1470 = vsub.f32 %v1467, %v1469
    %v1471 = vmul.f32 %v1470, 1.442695
    %v1472 = vpow.pop %v1471
    %1473 = vadd.xlane.f32.xlu0 %v1472
    %v1474 = vpop.xlane.xlu0 %1473
    %v1475 = vrcp.pop %v1474
    %v1476 = vmul.f32 %v1472, %v1475
    %1477 = vst [vmem:[%s9] sm:$0xff] %v1476
    // Predicated region
    $region46: #{decoder_forward.1} parent=1 // pred_check
      _
    $region47: #{decoder_forward.1} parent=1 // pred_check_branch
      %1479 = sbr.rel (0) target = $region49
    $region48: #{decoder_forward.1} parent=1 // pred_region
      _
    $region49: #{decoder_forward.1} parent=1 // pred_fallthru
      _
    // Predicated region
    $region50: #{decoder_forward.1} parent=1 // pred_check
      _
    $region51: #{decoder_forward.1} parent=1 // pred_check_branch
      %1481 = sbr.rel (0) target = $region53
    $region52: #{decoder_forward.1} parent=1 // pred_region
      _
    $region53: #{decoder_forward.1} parent=1 // pred_fallthru
      _
    // Predicated region
    $region54: #{decoder_forward.1} parent=1 // pred_check
      _
    $region55: #{decoder_forward.1} parent=1 // pred_check_branch
      %1483 = sbr.rel (0) target = $region57
    $region56: #{decoder_forward.1} parent=1 // pred_region
      _
    $region57: #{decoder_forward.1} parent=1 // pred_fallthru
      _
    // Predicated region
    $region58: #{decoder_forward.1} parent=1 // pred_check
      _
    $region59: #{decoder_forward.1} parent=1 // pred_check_branch
      %1485 = sbr.rel (0) target = $region61
    $region60: #{decoder_forward.1} parent=1 // pred_region
      _
    $region61: #{decoder_forward.1} parent=1 // pred_fallthru
      _
    %1486 = vsyncpa [#allocation3], 1
    %1487 = vsyncpa [#allocation5], 1

</llo_original>
